<compile_context>
chip_gen: v7x
topology: tpu7x:2x2x1
jax: 0.10.0
libtpu: 0.0.40
codegen_flags: <defaults>
</compile_context>

<pallas_src>
import functools

import jax
import jax.numpy as jnp
import numpy as np
from jax.experimental import pallas as pl
from jax.experimental.pallas import tpu as pltpu


def _round_up(v, m):
    return (v + m - 1) // m * m


def _lowrank_ae_kernel(x_ref, w1_ref, gb_ref, w2_ref, b2_ref, o_ref,
                       *, grid_vals, n_bins, fout_p, inv_t):
    """Fused encoder matmul + two-pass softmax expectation + decoder + ReLU."""
    # Single fused encoder matmul (bf16 MXU, f32 acc). 1/T is applied to the
    # f32 accumulator (NOT folded into bf16 W1); (b1+gumbel)/T streamed bf16.
    logits = jnp.dot(x_ref[...], w1_ref[...], preferred_element_type=jnp.float32)
    logits = logits * inv_t + gb_ref[...].astype(jnp.float32)    # (TB, nb*Fout_p)

    # Two-pass softmax-expectation over the bin axis; bin n lives in the static,
    # 128-aligned column slice [n*Fout_p, (n+1)*Fout_p). Logits are already
    # fully materialized, so this halves exp count vs. an online formulation.
    m = logits[:, 0:fout_p]
    for n in range(1, n_bins):
        m = jnp.maximum(m, logits[:, n * fout_p:(n + 1) * fout_p])
    denom = jnp.zeros_like(m)
    numer = jnp.zeros_like(m)
    for n in range(n_bins):
        e = jnp.exp(logits[:, n * fout_p:(n + 1) * fout_p] - m)
        denom = denom + e
        numer = numer + e * grid_vals[n]
    encoded = numer * pl.reciprocal(denom, approx=True)          # (TB, Fout_p)

    # Decoder: Linear(out_features -> in_features) + ReLU (bf16 MXU, f32 acc).
    dec = jnp.dot(encoded.astype(w2_ref.dtype), w2_ref[...],
                  preferred_element_type=jnp.float32) + b2_ref[...]
    o_ref[...] = jnp.maximum(dec, 0.0).astype(o_ref.dtype)


def _vmem_budget_bytes():
    """~85% of physical per-core VMEM (v5e/v6e: ~109 MiB, v7x: ~54 MiB)."""
    try:
        cap = int(pltpu.get_tpu_info().vmem_capacity_bytes)
    except Exception:
        cap = 64 * 2**20          # conservative (v7x-sized) fallback
    return int(cap * 0.85)


def _default_batch_tile():
    try:
        kind = jax.devices()[0].device_kind.lower()
    except Exception:
        return 128
    # v5e (and older) MXUs are 128-wide: M=128 already fills them.
    if any(t in kind for t in ("v2", "v3", "v4", "v5 lite", "v5lite", "v5e")):
        return 128
    return 256                     # v6e / v7x: 256-wide MXU


def _vmem_footprint(tb, fin_p, fout_p, nbfp, out_itemsize, single_buffer_resident):
    resident = fin_p * nbfp * 2 + fout_p * fin_p * 2 + fin_p * 4
    if not single_buffer_resident:
        resident *= 2
    streamed = 2 * tb * (fin_p * 2 + nbfp * 2 + fin_p * out_itemsize)  # 2x buffered
    live = tb * (nbfp * 4 + 4 * fout_p * 4 + fin_p * 4)                # logits + temps
    return resident + streamed + live


def _resident_spec(shape, single_buffer):
    index_map = lambda i: (0,) * len(shape)
    if single_buffer:
        # Constant-index (resident) operand: one VMEM copy instead of the
        # default double buffer (W1 is the dominant VMEM consumer).
        return pl.BlockSpec(shape, index_map, pipeline_mode=pl.Buffered(1))
    return pl.BlockSpec(shape, index_map)


def prepare_lowrank_params(w1, b1, w2, b2, n_bins, temperature):
    """One-time weight relayout / pad / cast (hoisted out of the per-call path).

    w1, b1: torch Linear(Fin, nb*Fout) params: (nb*Fout, Fin), (nb*Fout,)
    w2, b2: torch Linear(Fout, Fin)    params: (Fin, Fout),    (Fin,)
    """
    nb = n_bins
    Fin = w1.shape[1]
    Fout = w2.shape[1]
    Fin_p = _round_up(Fin, 128)
    Fout_p = _round_up(Fout, 128)
    nbFp = nb * Fout_p
    inv_t = 1.0 / float(temperature)
    f32, bf16 = jnp.float32, jnp.bfloat16

    # Encoder weight: torch flat output index k = o*nb + n; target layout is
    # (Fin_p, nb*Fout_p) with bin-major columns c = n*Fout_p + o so each bin's
    # logits are a static 128-aligned column slice of ONE fused MXU matmul.
    # Kept UNSCALED bf16 (1/T is applied to the f32 accumulator in-kernel).
    w1_3d = jnp.asarray(w1, f32).reshape(Fout, nb, Fin)       # [o, n, f]
    w1_no = jnp.transpose(w1_3d, (1, 0, 2))                   # [n, o, f]
    w1_no = jnp.pad(w1_no, ((0, 0), (0, Fout_p - Fout), (0, Fin_p - Fin)))
    w1_k = jnp.transpose(w1_no, (2, 0, 1)).reshape(Fin_p, nbFp).astype(bf16)

    # b1 in bin-major (n, o) layout; folded into the per-call gumbel addend.
    b1_no = jnp.asarray(b1, f32).reshape(Fout, nb).T           # (nb, Fout)

    # Decoder: zero-padded rows (o >= Fout) keep padded 'encoded' lanes inert.
    w2_k = jnp.pad(jnp.asarray(w2, f32).T,
                   ((0, Fout_p - Fout), (0, Fin_p - Fin))).astype(bf16)
    b2_k = jnp.pad(jnp.asarray(b2, f32), (0, Fin_p - Fin)).reshape(1, Fin_p)

    return dict(w1=w1_k, b1_no=b1_no, w2=w2_k, b2=b2_k,
                fin=Fin, fout=Fout, nb=nb, fin_p=Fin_p, fout_p=Fout_p,
                inv_t=inv_t)


def lowrank_autoencoder_forward(x, params, grid_vals, gumbel_noise, *, tb=None):
    """Per-call glue (batch pad, gumbel transport, tile/VMEM policy) + pallas_call.

    x:            (B, Fin)
    params:       output of prepare_lowrank_params (resident, pre-laid-out weights)
    grid_vals:    python sequence of nb bin values
    gumbel_noise: (B, Fout, nb) pre-drawn Gumbel noise
    """
    B, Fin = x.shape
    Fout, nb = params["fout"], params["nb"]
    Fin_p, Fout_p = params["fin_p"], params["fout_p"]
    inv_t = params["inv_t"]
    nbFp = nb * Fout_p
    out_dtype = x.dtype
    out_itemsize = jnp.dtype(out_dtype).itemsize
    f32, bf16 = jnp.float32, jnp.bfloat16

    budget = _vmem_budget_bytes()
    B8 = _round_up(B, 8)
    if tb is None:
        tb = max(8, _round_up(min(_default_batch_tile(), B8), 8))
        while tb > 8 and 1.5 * _vmem_footprint(tb, Fin_p, Fout_p, nbFp,
                                               out_itemsize, True) > budget:
            tb = max(8, _round_up(tb // 2, 8))
    else:
        tb = max(8, _round_up(tb, 8))
    B_p = _round_up(B8, tb)
    num_tiles = B_p // tb

    # Streamed inputs.
    x_k = jnp.pad(x, ((0, B_p - B), (0, Fin_p - Fin))).astype(bf16)

    # (b1 + gumbel)/T in bin-major columns, streamed as bf16 (upcast in-kernel).
    # TODO(synk): for HBM-bound configs, generate the Gumbel noise on-chip with
    # pltpu.prng_seed/prng_random_bits instead of streaming it at all.
    g_t = jnp.transpose(gumbel_noise, (0, 2, 1))               # (B, nb, Fout)
    gb = (g_t + params["b1_no"][None]) * inv_t
    gb = jnp.pad(gb, ((0, B_p - B), (0, 0), (0, Fout_p - Fout)))
    gb_k = gb.reshape(B_p, nbFp).astype(bf16)

    kernel = functools.partial(
        _lowrank_ae_kernel,
        grid_vals=tuple(float(v) for v in grid_vals),
        n_bins=nb, fout_p=Fout_p, inv_t=inv_t)

    # TODO(synk): very large W1 (> ~1/3 of per-TC VMEM, esp. v7x) would need a
    # second 'arbitrary' grid axis over bin-column chunks with scratch
    # accumulators; not needed at these sizes.
    def _run(single_buffer_resident):
        vmem_limit = int(min(budget, max(
            16 * 2**20,
            1.5 * _vmem_footprint(tb, Fin_p, Fout_p, nbFp, out_itemsize,
                                  single_buffer_resident))))
        return pl.pallas_call(
            kernel,
            out_shape=jax.ShapeDtypeStruct((B_p, Fin_p), out_dtype),
            grid=(num_tiles,),
            in_specs=[
                pl.BlockSpec((tb, Fin_p), lambda i: (i, 0)),              # x (streamed)
                _resident_spec((Fin_p, nbFp), single_buffer_resident),    # W1 (resident)
                pl.BlockSpec((tb, nbFp), lambda i: (i, 0)),               # (b1+g)/T bf16
                _resident_spec((Fout_p, Fin_p), single_buffer_resident),  # W2 (resident)
                _resident_spec((1, Fin_p), single_buffer_resident),       # b2 (resident)
            ],
            out_specs=pl.BlockSpec((tb, Fin_p), lambda i: (i, 0)),
            compiler_params=pltpu.CompilerParams(
                dimension_semantics=("parallel",),
                vmem_limit_bytes=vmem_limit),
        )(x_k, params["w1"], gb_k, params["w2"], params["b2"])

    try:
        out_p = _run(True)
    except Exception:
        # Fallback if pipeline_mode=pl.Buffered(1) is unsupported on this jax
        # version: accept default double-buffered resident weights.
        out_p = _run(False)

    return out_p[:B, :Fin]


def _reference_forward(x, w1, b1, w2, b2, grid_vals, gumbel_noise, temperature):
    """Pure-JAX reference mirroring the PyTorch module (gumbell path + ReLU).

    Matmuls are bf16 (f32 acc) to mirror the kernel's MXU policy, and the
    (b1 + gumbel)/T addend goes through the same bf16 rounding as the kernel's
    streamed noise transport (the noise is runtime randomness in the original
    module, so its transport precision is not part of the spec).
    """
    B, Fin = x.shape
    Fout = w2.shape[1]
    nb = len(grid_vals)
    inv_t = 1.0 / float(temperature)
    mm = jnp.dot(x.astype(jnp.bfloat16), w1.T.astype(jnp.bfloat16),
                 preferred_element_type=jnp.float32).reshape(B, Fout, nb)
    addend = ((b1.reshape(Fout, nb)[None] + gumbel_noise) * inv_t
              ).astype(jnp.bfloat16).astype(jnp.float32)
    y = jax.nn.softmax(mm * inv_t + addend, axis=-1)
    encoded = jnp.sum(y * jnp.asarray(grid_vals)[None, None, :], axis=-1)
    dec = jnp.dot(encoded.astype(jnp.bfloat16), w2.T.astype(jnp.bfloat16),
                  preferred_element_type=jnp.float32) + b2
    return jnp.maximum(dec, 0.0)


if __name__ == "__main__":
    # Small, module-consistent shapes (2 batch tiles to exercise the grid).
    B, Fin, Fout, nb = 16, 64, 32, 8
    temperature = 0.5
    grid_vals = [float(v) for v in np.linspace(-1.0, 1.0, nb)]  # fixed bin values

    key = jax.random.PRNGKey(0)
    kx, kw1, kb1, kw2, kb2, kg = jax.random.split(key, 6)

    x = jax.random.normal(kx, (B, Fin), dtype=jnp.float32)

    # torch nn.Linear default-style init (uniform +-1/sqrt(fan_in)), deterministic.
    bound1 = 1.0 / np.sqrt(Fin)
    w1 = jax.random.uniform(kw1, (nb * Fout, Fin), jnp.float32, -bound1, bound1)
    b1 = jax.random.uniform(kb1, (nb * Fout,), jnp.float32, -bound1, bound1)
    bound2 = 1.0 / np.sqrt(Fout)
    w2 = jax.random.uniform(kw2, (Fin, Fout), jnp.float32, -bound2, bound2)
    b2 = jax.random.uniform(kb2, (Fin,), jnp.float32, -bound2, bound2)

    # Deterministic Gumbel noise (stand-in for torch's runtime randomness).
    u = jax.random.uniform(kg, (B, Fout, nb), jnp.float32, 1e-6, 1.0 - 1e-6)
    gumbel = -jnp.log(-jnp.log(u))

    params = prepare_lowrank_params(w1, b1, w2, b2, nb, temperature)
    out = lowrank_autoencoder_forward(x, params, grid_vals, gumbel, tb=8)
    out = jax.block_until_ready(out)

    ref = _reference_forward(x, w1, b1, w2, b2, grid_vals, gumbel, temperature)
    np.testing.assert_allclose(np.asarray(out), np.asarray(ref),
                               rtol=2e-2, atol=2e-2)

    print("KERNEL_OK")
</pallas_src>

<mosaic_0001>
module attributes {stable_mosaic.version = 11 : i64} {
  func.func @_lowrank_ae_kernel(%arg0: i32, %arg1: memref<8x128xbf16, #tpu.memory_space<vmem>>, %arg2: memref<128x1024xbf16, #tpu.memory_space<vmem>>, %arg3: memref<8x1024xbf16, #tpu.memory_space<vmem>>, %arg4: memref<128x128xbf16, #tpu.memory_space<vmem>>, %arg5: memref<1x128xf32, #tpu.memory_space<vmem>>, %arg6: memref<8x128xf32, #tpu.memory_space<vmem>>) attributes {dimension_semantics = [#tpu.dimension_semantics<parallel>], iteration_bounds = array<i64: 2>, scalar_prefetch = 0 : i64, scratch_operands = 0 : i64, tpu.core_type = #tpu.core_type<tc>, window_params = [{transform_indices = @transform_0, window_bounds = array<i64: 8, 128>}, {pipeline_mode = #tpu.pipeline_mode<synchronous>, transform_indices = @transform_1, window_bounds = array<i64: 128, 1024>}, {transform_indices = @transform_2, window_bounds = array<i64: 8, 1024>}, {pipeline_mode = #tpu.pipeline_mode<synchronous>, transform_indices = @transform_3, window_bounds = array<i64: 128, 128>}, {pipeline_mode = #tpu.pipeline_mode<synchronous>, transform_indices = @transform_4, window_bounds = array<i64: 1, 128>}, {transform_indices = @transform_5, window_bounds = array<i64: 8, 128>}]} {
    %c0 = arith.constant 0 : index
    %c0_0 = arith.constant 0 : index
    %0 = vector.load %arg1[%c0, %c0_0] : memref<8x128xbf16, #tpu.memory_space<vmem>>, vector<8x128xbf16>
    %c0_1 = arith.constant 0 : index
    %c0_2 = arith.constant 0 : index
    %1 = vector.load %arg2[%c0_1, %c0_2] : memref<128x1024xbf16, #tpu.memory_space<vmem>>, vector<128x1024xbf16>
    %cst = arith.constant dense<0.000000e+00> : vector<8x1024xf32>
    %2 = tpu.matmul %0, %1, %cst {dimension_numbers = #tpu.dot_dimension_numbers<[1], [0], [0], [1], [0, 0, 1, 1], [], []>} : vector<8x128xbf16>, vector<128x1024xbf16>, vector<8x1024xf32> -> vector<8x1024xf32>
    %cst_3 = arith.constant 2.000000e+00 : f32
    %3 = vector.broadcast %cst_3 : f32 to vector<8x1024xf32>
    %4 = arith.mulf %2, %3 : vector<8x1024xf32>
    %c0_4 = arith.constant 0 : index
    %c0_5 = arith.constant 0 : index
    %5 = vector.load %arg3[%c0_4, %c0_5] : memref<8x1024xbf16, #tpu.memory_space<vmem>>, vector<8x1024xbf16>
    %6 = arith.extf %5 : vector<8x1024xbf16> to vector<8x1024xf32>
    %7 = arith.addf %4, %6 : vector<8x1024xf32>
    %8 = vector.extract_strided_slice %7 {offsets = [0, 0], sizes = [8, 128], strides = [1, 1]} : vector<8x1024xf32> to vector<8x128xf32>
    %9 = vector.extract_strided_slice %7 {offsets = [0, 128], sizes = [8, 128], strides = [1, 1]} : vector<8x1024xf32> to vector<8x128xf32>
    %10 = arith.maximumf %8, %9 : vector<8x128xf32>
    %11 = vector.extract_strided_slice %7 {offsets = [0, 256], sizes = [8, 128], strides = [1, 1]} : vector<8x1024xf32> to vector<8x128xf32>
    %12 = arith.maximumf %10, %11 : vector<8x128xf32>
    %13 = vector.extract_strided_slice %7 {offsets = [0, 384], sizes = [8, 128], strides = [1, 1]} : vector<8x1024xf32> to vector<8x128xf32>
    %14 = arith.maximumf %12, %13 : vector<8x128xf32>
    %15 = vector.extract_strided_slice %7 {offsets = [0, 512], sizes = [8, 128], strides = [1, 1]} : vector<8x1024xf32> to vector<8x128xf32>
    %16 = arith.maximumf %14, %15 : vector<8x128xf32>
    %17 = vector.extract_strided_slice %7 {offsets = [0, 640], sizes = [8, 128], strides = [1, 1]} : vector<8x1024xf32> to vector<8x128xf32>
    %18 = arith.maximumf %16, %17 : vector<8x128xf32>
    %19 = vector.extract_strided_slice %7 {offsets = [0, 768], sizes = [8, 128], strides = [1, 1]} : vector<8x1024xf32> to vector<8x128xf32>
    %20 = arith.maximumf %18, %19 : vector<8x128xf32>
    %21 = vector.extract_strided_slice %7 {offsets = [0, 896], sizes = [8, 128], strides = [1, 1]} : vector<8x1024xf32> to vector<8x128xf32>
    %22 = arith.maximumf %20, %21 : vector<8x128xf32>
    %cst_6 = arith.constant 0.000000e+00 : f32
    %23 = vector.broadcast %cst_6 : f32 to vector<8x128xf32>
    %cst_7 = arith.constant 0.000000e+00 : f32
    %24 = vector.broadcast %cst_7 : f32 to vector<8x128xf32>
    %25 = vector.extract_strided_slice %7 {offsets = [0, 0], sizes = [8, 128], strides = [1, 1]} : vector<8x1024xf32> to vector<8x128xf32>
    %26 = arith.subf %25, %22 : vector<8x128xf32>
    %27 = math.exp %26 : vector<8x128xf32>
    %28 = arith.addf %23, %27 : vector<8x128xf32>
    %cst_8 = arith.constant -1.000000e+00 : f32
    %29 = vector.broadcast %cst_8 : f32 to vector<8x128xf32>
    %30 = arith.mulf %27, %29 : vector<8x128xf32>
    %31 = arith.addf %24, %30 : vector<8x128xf32>
    %32 = vector.extract_strided_slice %7 {offsets = [0, 128], sizes = [8, 128], strides = [1, 1]} : vector<8x1024xf32> to vector<8x128xf32>
    %33 = arith.subf %32, %22 : vector<8x128xf32>
    %34 = math.exp %33 : vector<8x128xf32>
    %35 = arith.addf %28, %34 : vector<8x128xf32>
    %cst_9 = arith.constant -0.714285731 : f32
    %36 = vector.broadcast %cst_9 : f32 to vector<8x128xf32>
    %37 = arith.mulf %34, %36 : vector<8x128xf32>
    %38 = arith.addf %31, %37 : vector<8x128xf32>
    %39 = vector.extract_strided_slice %7 {offsets = [0, 256], sizes = [8, 128], strides = [1, 1]} : vector<8x1024xf32> to vector<8x128xf32>
    %40 = arith.subf %39, %22 : vector<8x128xf32>
    %41 = math.exp %40 : vector<8x128xf32>
    %42 = arith.addf %35, %41 : vector<8x128xf32>
    %cst_10 = arith.constant -0.428571433 : f32
    %43 = vector.broadcast %cst_10 : f32 to vector<8x128xf32>
    %44 = arith.mulf %41, %43 : vector<8x128xf32>
    %45 = arith.addf %38, %44 : vector<8x128xf32>
    %46 = vector.extract_strided_slice %7 {offsets = [0, 384], sizes = [8, 128], strides = [1, 1]} : vector<8x1024xf32> to vector<8x128xf32>
    %47 = arith.subf %46, %22 : vector<8x128xf32>
    %48 = math.exp %47 : vector<8x128xf32>
    %49 = arith.addf %42, %48 : vector<8x128xf32>
    %cst_11 = arith.constant -0.142857149 : f32
    %50 = vector.broadcast %cst_11 : f32 to vector<8x128xf32>
    %51 = arith.mulf %48, %50 : vector<8x128xf32>
    %52 = arith.addf %45, %51 : vector<8x128xf32>
    %53 = vector.extract_strided_slice %7 {offsets = [0, 512], sizes = [8, 128], strides = [1, 1]} : vector<8x1024xf32> to vector<8x128xf32>
    %54 = arith.subf %53, %22 : vector<8x128xf32>
    %55 = math.exp %54 : vector<8x128xf32>
    %56 = arith.addf %49, %55 : vector<8x128xf32>
    %cst_12 = arith.constant 0.142857149 : f32
    %57 = vector.broadcast %cst_12 : f32 to vector<8x128xf32>
    %58 = arith.mulf %55, %57 : vector<8x128xf32>
    %59 = arith.addf %52, %58 : vector<8x128xf32>
    %60 = vector.extract_strided_slice %7 {offsets = [0, 640], sizes = [8, 128], strides = [1, 1]} : vector<8x1024xf32> to vector<8x128xf32>
    %61 = arith.subf %60, %22 : vector<8x128xf32>
    %62 = math.exp %61 : vector<8x128xf32>
    %63 = arith.addf %56, %62 : vector<8x128xf32>
    %cst_13 = arith.constant 0.428571433 : f32
    %64 = vector.broadcast %cst_13 : f32 to vector<8x128xf32>
    %65 = arith.mulf %62, %64 : vector<8x128xf32>
    %66 = arith.addf %59, %65 : vector<8x128xf32>
    %67 = vector.extract_strided_slice %7 {offsets = [0, 768], sizes = [8, 128], strides = [1, 1]} : vector<8x1024xf32> to vector<8x128xf32>
    %68 = arith.subf %67, %22 : vector<8x128xf32>
    %69 = math.exp %68 : vector<8x128xf32>
    %70 = arith.addf %63, %69 : vector<8x128xf32>
    %cst_14 = arith.constant 0.714285731 : f32
    %71 = vector.broadcast %cst_14 : f32 to vector<8x128xf32>
    %72 = arith.mulf %69, %71 : vector<8x128xf32>
    %73 = arith.addf %66, %72 : vector<8x128xf32>
    %74 = vector.extract_strided_slice %7 {offsets = [0, 896], sizes = [8, 128], strides = [1, 1]} : vector<8x1024xf32> to vector<8x128xf32>
    %75 = arith.subf %74, %22 : vector<8x128xf32>
    %76 = math.exp %75 : vector<8x128xf32>
    %77 = arith.addf %70, %76 : vector<8x128xf32>
    %cst_15 = arith.constant 1.000000e+00 : f32
    %78 = vector.broadcast %cst_15 : f32 to vector<8x128xf32>
    %79 = arith.mulf %76, %78 : vector<8x128xf32>
    %80 = arith.addf %73, %79 : vector<8x128xf32>
    %81 = tpu.reciprocal %77 {approx = true} : vector<8x128xf32> -> vector<8x128xf32>
    %82 = arith.mulf %80, %81 : vector<8x128xf32>
    %83 = arith.truncf %82 : vector<8x128xf32> to vector<8x128xbf16>
    %c0_16 = arith.constant 0 : index
    %c0_17 = arith.constant 0 : index
    %84 = vector.load %arg4[%c0_16, %c0_17] : memref<128x128xbf16, #tpu.memory_space<vmem>>, vector<128x128xbf16>
    %cst_18 = arith.constant dense<0.000000e+00> : vector<8x128xf32>
    %85 = tpu.matmul %83, %84, %cst_18 {dimension_numbers = #tpu.dot_dimension_numbers<[1], [0], [0], [1], [0, 0, 1, 1], [], []>} : vector<8x128xbf16>, vector<128x128xbf16>, vector<8x128xf32> -> vector<8x128xf32>
    %c0_19 = arith.constant 0 : index
    %c0_20 = arith.constant 0 : index
    %86 = vector.load %arg5[%c0_19, %c0_20] : memref<1x128xf32, #tpu.memory_space<vmem>>, vector<1x128xf32>
    %87 = vector.broadcast %86 : vector<1x128xf32> to vector<8x128xf32>
    %88 = arith.addf %85, %87 : vector<8x128xf32>
    %cst_21 = arith.constant 0.000000e+00 : f32
    %89 = vector.broadcast %cst_21 : f32 to vector<8x128xf32>
    %90 = arith.maximumf %88, %89 : vector<8x128xf32>
    %c0_22 = arith.constant 0 : index
    %c0_23 = arith.constant 0 : index
    %91 = vector.load %arg6[%c0_22, %c0_23] : memref<8x128xf32, #tpu.memory_space<vmem>>, vector<8x128xf32>
    tpu.vector_store %arg6[%c0_22, %c0_23], %90 {strides = array<i32>} : memref<8x128xf32, #tpu.memory_space<vmem>>, vector<8x128xf32>,
    return
  }
  func.func @transform_0(%arg0: i32) -> (i32, i32) {
    %c0_i32 = arith.constant 0 : i32
    %c0_i32_0 = arith.constant 0 : i32
    return %arg0, %c0_i32 : i32, i32
  }
  func.func @transform_1(%arg0: i32) -> (i32, i32) {
    %c0_i32 = arith.constant 0 : i32
    %c0_i32_0 = arith.constant 0 : i32
    %c0_i32_1 = arith.constant 0 : i32
    return %c0_i32, %c0_i32_0 : i32, i32
  }
  func.func @transform_2(%arg0: i32) -> (i32, i32) {
    %c0_i32 = arith.constant 0 : i32
    %c0_i32_0 = arith.constant 0 : i32
    return %arg0, %c0_i32 : i32, i32
  }
  func.func @transform_3(%arg0: i32) -> (i32, i32) {
    %c0_i32 = arith.constant 0 : i32
    %c0_i32_0 = arith.constant 0 : i32
    %c0_i32_1 = arith.constant 0 : i32
    return %c0_i32, %c0_i32_0 : i32, i32
  }
  func.func @transform_4(%arg0: i32) -> (i32, i32) {
    %c0_i32 = arith.constant 0 : i32
    %c0_i32_0 = arith.constant 0 : i32
    %c0_i32_1 = arith.constant 0 : i32
    return %c0_i32, %c0_i32_0 : i32, i32
  }
  func.func @transform_5(%arg0: i32) -> (i32, i32) {
    %c0_i32 = arith.constant 0 : i32
    %c0_i32_0 = arith.constant 0 : i32
    return %arg0, %c0_i32 : i32, i32
  }
}

module attributes {stable_mosaic.version = 11 : i64} {
  func.func @_lowrank_ae_kernel(%arg0: i32, %arg1: memref<8x128xbf16, #tpu.memory_space<vmem>>, %arg2: memref<128x1024xbf16, #tpu.memory_space<vmem>>, %arg3: memref<8x1024xbf16, #tpu.memory_space<vmem>>, %arg4: memref<128x128xbf16, #tpu.memory_space<vmem>>, %arg5: memref<1x128xf32, #tpu.memory_space<vmem>>, %arg6: memref<8x128xf32, #tpu.memory_space<vmem>>) attributes {dimension_semantics = [#tpu.dimension_semantics<parallel>], iteration_bounds = array<i64: 2>, scalar_prefetch = 0 : i64, scratch_operands = 0 : i64, tpu.core_type = #tpu.core_type<tc>, window_params = [{transform_indices = @transform_0, window_bounds = array<i64: 8, 128>}, {pipeline_mode = #tpu.pipeline_mode<synchronous>, transform_indices = @transform_1, window_bounds = array<i64: 128, 1024>}, {transform_indices = @transform_2, window_bounds = array<i64: 8, 1024>}, {pipeline_mode = #tpu.pipeline_mode<synchronous>, transform_indices = @transform_3, window_bounds = array<i64: 128, 128>}, {pipeline_mode = #tpu.pipeline_mode<synchronous>, transform_indices = @transform_4, window_bounds = array<i64: 1, 128>}, {transform_indices = @transform_5, window_bounds = array<i64: 8, 128>}]} {
    %c0 = arith.constant 0 : index
    %c0_0 = arith.constant 0 : index
    %0 = vector.load %arg1[%c0, %c0_0] : memref<8x128xbf16, #tpu.memory_space<vmem>>, vector<8x128xbf16>
    %c0_1 = arith.constant 0 : index
    %c0_2 = arith.constant 0 : index
    %1 = vector.load %arg2[%c0_1, %c0_2] : memref<128x1024xbf16, #tpu.memory_space<vmem>>, vector<128x1024xbf16>
    %cst = arith.constant dense<0.000000e+00> : vector<8x1024xf32>
    %2 = tpu.matmul %0, %1, %cst {dimension_numbers = #tpu.dot_dimension_numbers<[1], [0], [0], [1], [0, 0, 1, 1], [], []>} : vector<8x128xbf16>, vector<128x1024xbf16>, vector<8x1024xf32> -> vector<8x1024xf32>
    %cst_3 = arith.constant 2.000000e+00 : f32
    %3 = vector.broadcast %cst_3 : f32 to vector<8x1024xf32>
    %4 = arith.mulf %2, %3 : vector<8x1024xf32>
    %c0_4 = arith.constant 0 : index
    %c0_5 = arith.constant 0 : index
    %5 = vector.load %arg3[%c0_4, %c0_5] : memref<8x1024xbf16, #tpu.memory_space<vmem>>, vector<8x1024xbf16>
    %6 = arith.extf %5 : vector<8x1024xbf16> to vector<8x1024xf32>
    %7 = arith.addf %4, %6 : vector<8x1024xf32>
    %8 = vector.extract_strided_slice %7 {offsets = [0, 0], sizes = [8, 128], strides = [1, 1]} : vector<8x1024xf32> to vector<8x128xf32>
    %9 = vector.extract_strided_slice %7 {offsets = [0, 128], sizes = [8, 128], strides = [1, 1]} : vector<8x1024xf32> to vector<8x128xf32>
    %10 = arith.maximumf %8, %9 : vector<8x128xf32>
    %11 = vector.extract_strided_slice %7 {offsets = [0, 256], sizes = [8, 128], strides = [1, 1]} : vector<8x1024xf32> to vector<8x128xf32>
    %12 = arith.maximumf %10, %11 : vector<8x128xf32>
    %13 = vector.extract_strided_slice %7 {offsets = [0, 384], sizes = [8, 128], strides = [1, 1]} : vector<8x1024xf32> to vector<8x128xf32>
    %14 = arith.maximumf %12, %13 : vector<8x128xf32>
    %15 = vector.extract_strided_slice %7 {offsets = [0, 512], sizes = [8, 128], strides = [1, 1]} : vector<8x1024xf32> to vector<8x128xf32>
    %16 = arith.maximumf %14, %15 : vector<8x128xf32>
    %17 = vector.extract_strided_slice %7 {offsets = [0, 640], sizes = [8, 128], strides = [1, 1]} : vector<8x1024xf32> to vector<8x128xf32>
    %18 = arith.maximumf %16, %17 : vector<8x128xf32>
    %19 = vector.extract_strided_slice %7 {offsets = [0, 768], sizes = [8, 128], strides = [1, 1]} : vector<8x1024xf32> to vector<8x128xf32>
    %20 = arith.maximumf %18, %19 : vector<8x128xf32>
    %21 = vector.extract_strided_slice %7 {offsets = [0, 896], sizes = [8, 128], strides = [1, 1]} : vector<8x1024xf32> to vector<8x128xf32>
    %22 = arith.maximumf %20, %21 : vector<8x128xf32>
    %cst_6 = arith.constant 0.000000e+00 : f32
    %23 = vector.broadcast %cst_6 : f32 to vector<8x128xf32>
    %cst_7 = arith.constant 0.000000e+00 : f32
    %24 = vector.broadcast %cst_7 : f32 to vector<8x128xf32>
    %25 = vector.extract_strided_slice %7 {offsets = [0, 0], sizes = [8, 128], strides = [1, 1]} : vector<8x1024xf32> to vector<8x128xf32>
    %26 = arith.subf %25, %22 : vector<8x128xf32>
    %27 = math.exp %26 : vector<8x128xf32>
    %28 = arith.addf %23, %27 : vector<8x128xf32>
    %cst_8 = arith.constant -1.000000e+00 : f32
    %29 = vector.broadcast %cst_8 : f32 to vector<8x128xf32>
    %30 = arith.mulf %27, %29 : vector<8x128xf32>
    %31 = arith.addf %24, %30 : vector<8x128xf32>
    %32 = vector.extract_strided_slice %7 {offsets = [0, 128], sizes = [8, 128], strides = [1, 1]} : vector<8x1024xf32> to vector<8x128xf32>
    %33 = arith.subf %32, %22 : vector<8x128xf32>
    %34 = math.exp %33 : vector<8x128xf32>
    %35 = arith.addf %28, %34 : vector<8x128xf32>
    %cst_9 = arith.constant -0.714285731 : f32
    %36 = vector.broadcast %cst_9 : f32 to vector<8x128xf32>
    %37 = arith.mulf %34, %36 : vector<8x128xf32>
    %38 = arith.addf %31, %37 : vector<8x128xf32>
    %39 = vector.extract_strided_slice %7 {offsets = [0, 256], sizes = [8, 128], strides = [1, 1]} : vector<8x1024xf32> to vector<8x128xf32>
    %40 = arith.subf %39, %22 : vector<8x128xf32>
    %41 = math.exp %40 : vector<8x128xf32>
    %42 = arith.addf %35, %41 : vector<8x128xf32>
    %cst_10 = arith.constant -0.428571433 : f32
    %43 = vector.broadcast %cst_10 : f32 to vector<8x128xf32>
    %44 = arith.mulf %41, %43 : vector<8x128xf32>
    %45 = arith.addf %38, %44 : vector<8x128xf32>
    %46 = vector.extract_strided_slice %7 {offsets = [0, 384], sizes = [8, 128], strides = [1, 1]} : vector<8x1024xf32> to vector<8x128xf32>
    %47 = arith.subf %46, %22 : vector<8x128xf32>
    %48 = math.exp %47 : vector<8x128xf32>
    %49 = arith.addf %42, %48 : vector<8x128xf32>
    %cst_11 = arith.constant -0.142857149 : f32
    %50 = vector.broadcast %cst_11 : f32 to vector<8x128xf32>
    %51 = arith.mulf %48, %50 : vector<8x128xf32>
    %52 = arith.addf %45, %51 : vector<8x128xf32>
    %53 = vector.extract_strided_slice %7 {offsets = [0, 512], sizes = [8, 128], strides = [1, 1]} : vector<8x1024xf32> to vector<8x128xf32>
    %54 = arith.subf %53, %22 : vector<8x128xf32>
    %55 = math.exp %54 : vector<8x128xf32>
    %56 = arith.addf %49, %55 : vector<8x128xf32>
    %cst_12 = arith.constant 0.142857149 : f32
    %57 = vector.broadcast %cst_12 : f32 to vector<8x128xf32>
    %58 = arith.mulf %55, %57 : vector<8x128xf32>
    %59 = arith.addf %52, %58 : vector<8x128xf32>
    %60 = vector.extract_strided_slice %7 {offsets = [0, 640], sizes = [8, 128], strides = [1, 1]} : vector<8x1024xf32> to vector<8x128xf32>
    %61 = arith.subf %60, %22 : vector<8x128xf32>
    %62 = math.exp %61 : vector<8x128xf32>
    %63 = arith.addf %56, %62 : vector<8x128xf32>
    %cst_13 = arith.constant 0.428571433 : f32
    %64 = vector.broadcast %cst_13 : f32 to vector<8x128xf32>
    %65 = arith.mulf %62, %64 : vector<8x128xf32>
    %66 = arith.addf %59, %65 : vector<8x128xf32>
    %67 = vector.extract_strided_slice %7 {offsets = [0, 768], sizes = [8, 128], strides = [1, 1]} : vector<8x1024xf32> to vector<8x128xf32>
    %68 = arith.subf %67, %22 : vector<8x128xf32>
    %69 = math.exp %68 : vector<8x128xf32>
    %70 = arith.addf %63, %69 : vector<8x128xf32>
    %cst_14 = arith.constant 0.714285731 : f32
    %71 = vector.broadcast %cst_14 : f32 to vector<8x128xf32>
    %72 = arith.mulf %69, %71 : vector<8x128xf32>
    %73 = arith.addf %66, %72 : vector<8x128xf32>
    %74 = vector.extract_strided_slice %7 {offsets = [0, 896], sizes = [8, 128], strides = [1, 1]} : vector<8x1024xf32> to vector<8x128xf32>
    %75 = arith.subf %74, %22 : vector<8x128xf32>
    %76 = math.exp %75 : vector<8x128xf32>
    %77 = arith.addf %70, %76 : vector<8x128xf32>
    %cst_15 = arith.constant 1.000000e+00 : f32
    %78 = vector.broadcast %cst_15 : f32 to vector<8x128xf32>
    %79 = arith.mulf %76, %78 : vector<8x128xf32>
    %80 = arith.addf %73, %79 : vector<8x128xf32>
    %81 = tpu.reciprocal %77 {approx = true} : vector<8x128xf32> -> vector<8x128xf32>
    %82 = arith.mulf %80, %81 : vector<8x128xf32>
    %83 = arith.truncf %82 : vector<8x128xf32> to vector<8x128xbf16>
    %c0_16 = arith.constant 0 : index
    %c0_17 = arith.constant 0 : index
    %84 = vector.load %arg4[%c0_16, %c0_17] : memref<128x128xbf16, #tpu.memory_space<vmem>>, vector<128x128xbf16>
    %cst_18 = arith.constant dense<0.000000e+00> : vector<8x128xf32>
    %85 = tpu.matmul %83, %84, %cst_18 {dimension_numbers = #tpu.dot_dimension_numbers<[1], [0], [0], [1], [0, 0, 1, 1], [], []>} : vector<8x128xbf16>, vector<128x128xbf16>, vector<8x128xf32> -> vector<8x128xf32>
    %c0_19 = arith.constant 0 : index
    %c0_20 = arith.constant 0 : index
    %86 = vector.load %arg5[%c0_19, %c0_20] : memref<1x128xf32, #tpu.memory_space<vmem>>, vector<1x128xf32>
    %87 = vector.broadcast %86 : vector<1x128xf32> to vector<8x128xf32>
    %88 = arith.addf %85, %87 : vector<8x128xf32>
    %cst_21 = arith.constant 0.000000e+00 : f32
    %89 = vector.broadcast %cst_21 : f32 to vector<8x128xf32>
    %90 = arith.maximumf %88, %89 : vector<8x128xf32>
    %c0_22 = arith.constant 0 : index
    %c0_23 = arith.constant 0 : index
    %91 = vector.load %arg6[%c0_22, %c0_23] : memref<8x128xf32, #tpu.memory_space<vmem>>, vector<8x128xf32>
    tpu.vector_store %arg6[%c0_22, %c0_23], %90 {strides = array<i32>} : memref<8x128xf32, #tpu.memory_space<vmem>>, vector<8x128xf32>,
    return
  }
  func.func @transform_0(%arg0: i32) -> (i32, i32) {
    %c0_i32 = arith.constant 0 : i32
    %c0_i32_0 = arith.constant 0 : i32
    return %arg0, %c0_i32 : i32, i32
  }
  func.func @transform_1(%arg0: i32) -> (i32, i32) {
    %c0_i32 = arith.constant 0 : i32
    %c0_i32_0 = arith.constant 0 : i32
    %c0_i32_1 = arith.constant 0 : i32
    return %c0_i32, %c0_i32_0 : i32, i32
  }
  func.func @transform_2(%arg0: i32) -> (i32, i32) {
    %c0_i32 = arith.constant 0 : i32
    %c0_i32_0 = arith.constant 0 : i32
    return %arg0, %c0_i32 : i32, i32
  }
  func.func @transform_3(%arg0: i32) -> (i32, i32) {
    %c0_i32 = arith.constant 0 : i32
    %c0_i32_0 = arith.constant 0 : i32
    %c0_i32_1 = arith.constant 0 : i32
    return %c0_i32, %c0_i32_0 : i32, i32
  }
  func.func @transform_4(%arg0: i32) -> (i32, i32) {
    %c0_i32 = arith.constant 0 : i32
    %c0_i32_0 = arith.constant 0 : i32
    %c0_i32_1 = arith.constant 0 : i32
    return %c0_i32, %c0_i32_0 : i32, i32
  }
  func.func @transform_5(%arg0: i32) -> (i32, i32) {
    %c0_i32 = arith.constant 0 : i32
    %c0_i32_0 = arith.constant 0 : i32
    return %arg0, %c0_i32 : i32, i32
  }
}

</mosaic_0001>

<llo_original>
// kernel: tpu_custom_call.1
$region0: #{tpu_custom_call.1}
  #allocation0 [shape = 'u32[]', space=smem, size = 0x4, offset = 0x4, fixed_abs, tag = 'smem constant byte address 0x4 - core index']
  #allocation1 [shape = 'u32[144,128]{1,0:T(1,128)}', space=vmem, size = 0x12000, scoped, tag = 'internal scratch']
  %s0 = inlined_call_operand.hbm [shape: bf16[16,128], index: 0, kind: input, shape index: {}]
  %s1 = inlined_call_operand.hbm [shape: bf16[128,1024], index: 1, kind: input, shape index: {}]
  %s2 = inlined_call_operand.hbm [shape: bf16[16,1024], index: 2, kind: input, shape index: {}]
  %s3 = inlined_call_operand.hbm [shape: bf16[128,128], index: 3, kind: input, shape index: {}]
  %s4 = inlined_call_operand.vmem [shape: f32[1,128], index: 4, kind: input, shape index: {}]
  %s5 = inlined_call_operand.hbm [shape: f32[16,128], index: 5, kind: output, shape index: {}]
  %s6 = sld [smem:[#allocation0]]
  $region69: #{tpu_custom_call.1} parent=0
    _
  %s8 = ssub.s32 1, %s6
  %s9 = scalar_select 0, %s8, %s6
  $region1: #{tpu_custom_call.1} parent=0
    #allocation2 [shape = 'u8[4096]{0}', space=vmem, size = 0x1000, scoped, tag = 'input window, operand 0']
    #allocation3 [shape = 's32[2]{0}', space=sflag, size = 0x8, scoped, tag = 'scoped memory for tpu_custom_call.1']
    #allocation4 [shape = 's32[2]{0}', space=sflag, size = 0x8, scoped, tag = 'scoped memory for tpu_custom_call.1']
    #allocation5 [shape = 'u8[262144]{0}', space=vmem, size = 0x40000, scoped, tag = 'input window, operand 1, single buffered']
    #allocation6 [shape = 's32[1]{0}', space=sflag, size = 0x4, scoped, tag = 'scoped memory for tpu_custom_call.1']
    #allocation7 [shape = 'u8[32768]{0}', space=vmem, size = 0x8000, scoped, tag = 'input window, operand 2']
    #allocation8 [shape = 'u8[32768]{0}', space=vmem, size = 0x8000, scoped, tag = 'input window, operand 3, single buffered']
    #allocation9 [shape = 'u8[8192]{0}', space=vmem, size = 0x2000, scoped, tag = 'output window, operand 0']
    %10 = vsyncpa [#allocation3], 0
    %s11 = scalar_lea.sflag [#allocation3], 1
    %12 = vsyncpa %s11, 0
    %13 = vsyncpa [#allocation6], 0
    %14 = vsyncpa [#allocation4], 0
    %s15 = scalar_lea.sflag [#allocation4], 1
    %16 = vsyncpa %s15, 0
    loop: start=0, step=1, limit=4
    $region2: #{tpu_custom_call.1} parent=1 // loop_pre_header
      _
    $region3: #{tpu_custom_call.1} parent=1 // loop_header
      %s18 = sphi 0, %s22
      %p19 = scmp.ge.s32.totalorder %s18, 4
      %s28 = sphi 0, %s30
      %s31 = sphi 0, %s28
      %s32 = sphi 0, %s31
      %s48 = sphi 0, %s32
      %s52 = sphi 0, %s52
      %s54 = sphi 0, %s52
      %s55 = sphi 0, %s54
      %s69 = sphi 0, %s55
      %s75 = sphi 0, %s77
      %s78 = sphi 0, %s75
      %s79 = sphi 0, %s78
      %s95 = sphi 0, %s79
      %s99 = sphi 0, %s99
      %s101 = sphi 0, %s99
      %s102 = sphi 0, %s101
      %s116 = sphi 0, %s102
      %s120 = sphi 0, %s120
      %s122 = sphi 0, %s120
      %s123 = sphi 0, %s122
      %s137 = sphi 0, %s123
      %s143 = sphi 0, %s145
      %s146 = sphi 0, %s143
      %s147 = sphi 0, %s146
      %s163 = sphi 0, %s147
    $region4: #{tpu_custom_call.1} parent=1 // loop_header_branch
      %21 = sbr.rel (%p19) target = $region8
    $region5: #{tpu_custom_call.1} parent=1 // loop_body
      %s23 = ssub.s32 %s18, 1
      %s24 = ssub.s32 %s18, 2
      %s25 = sadd.s32 %s18, 1
      %s26 = ssub.s32 %s18, %s25
      %p27 = scmp.eq.s32.totalorder %s26, 0
      %s29 = sadd.s32 %s28, 1
      %s30 = scalar_select %p27, %s28, %s29
      %p33 = pneg %p27
      %p34 = scmp.eq.s32.totalorder %s18, 1
      %p35 = por %p33, %p34
      %p36 = scmp.ne.s32.totalorder %s28, %s31
      %p37 = scmp.eq.s32.totalorder %s18, 0
      %p38 = por %p36, %p37
      %p39 = scmp.ne.s32.totalorder %s28, %s31
      %p40 = scmp.eq.s32.totalorder %s23, 1
      %p41 = por %p39, %p40
      %p42 = scmp.ne.s32.totalorder %s31, %s32
      %p43 = scmp.eq.s32.totalorder %s23, 0
      %p44 = por %p42, %p43
      %p45 = scmp.ne.s32.totalorder %s31, %s32
      %p46 = scmp.eq.s32.totalorder %s24, 1
      %p47 = por %p45, %p46
      %p49 = scmp.ne.s32.totalorder %s32, %s48
      %p50 = scmp.eq.s32.totalorder %s24, 0
      %p51 = por %p49, %p50
      %s53 = sadd.s32 %s52, 1
      %p56 = scmp.eq.s32.totalorder %s18, 1
      %p57 = scmp.ne.s32.totalorder %s52, %s54
      %p58 = scmp.eq.s32.totalorder %s18, 0
      %p59 = por %p57, %p58
      %p60 = scmp.ne.s32.totalorder %s52, %s54
      %p61 = scmp.eq.s32.totalorder %s23, 1
      %p62 = por %p60, %p61
      %p63 = scmp.ne.s32.totalorder %s54, %s55
      %p64 = scmp.eq.s32.totalorder %s23, 0
      %p65 = por %p63, %p64
      %p66 = scmp.ne.s32.totalorder %s54, %s55
      %p67 = scmp.eq.s32.totalorder %s24, 1
      %p68 = por %p66, %p67
      %p70 = scmp.ne.s32.totalorder %s55, %s69
      %p71 = scmp.eq.s32.totalorder %s24, 0
      %p72 = por %p70, %p71
      %s73 = ssub.s32 %s18, %s25
      %p74 = scmp.eq.s32.totalorder %s73, 0
      %s76 = sadd.s32 %s75, 1
      %s77 = scalar_select %p74, %s75, %s76
      %p80 = pneg %p74
      %p81 = scmp.eq.s32.totalorder %s18, 1
      %p82 = por %p80, %p81
      %p83 = scmp.ne.s32.totalorder %s75, %s78
      %p84 = scmp.eq.s32.totalorder %s18, 0
      %p85 = por %p83, %p84
      %p86 = scmp.ne.s32.totalorder %s75, %s78
      %p87 = scmp.eq.s32.totalorder %s23, 1
      %p88 = por %p86, %p87
      %p89 = scmp.ne.s32.totalorder %s78, %s79
      %p90 = scmp.eq.s32.totalorder %s23, 0
      %p91 = por %p89, %p90
      %p92 = scmp.ne.s32.totalorder %s78, %s79
      %p93 = scmp.eq.s32.totalorder %s24, 1
      %p94 = por %p92, %p93
      %p96 = scmp.ne.s32.totalorder %s79, %s95
      %p97 = scmp.eq.s32.totalorder %s24, 0
      %p98 = por %p96, %p97
      %s100 = sadd.s32 %s99, 1
      %p103 = scmp.eq.s32.totalorder %s18, 1
      %p104 = scmp.ne.s32.totalorder %s99, %s101
      %p105 = scmp.eq.s32.totalorder %s18, 0
      %p106 = por %p104, %p105
      %p107 = scmp.ne.s32.totalorder %s99, %s101
      %p108 = scmp.eq.s32.totalorder %s23, 1
      %p109 = por %p107, %p108
      %p110 = scmp.ne.s32.totalorder %s101, %s102
      %p111 = scmp.eq.s32.totalorder %s23, 0
      %p112 = por %p110, %p111
      %p113 = scmp.ne.s32.totalorder %s101, %s102
      %p114 = scmp.eq.s32.totalorder %s24, 1
      %p115 = por %p113, %p114
      %p117 = scmp.ne.s32.totalorder %s102, %s116
      %p118 = scmp.eq.s32.totalorder %s24, 0
      %p119 = por %p117, %p118
      %s121 = sadd.s32 %s120, 1
      %p124 = scmp.eq.s32.totalorder %s18, 1
      %p125 = scmp.ne.s32.totalorder %s120, %s122
      %p126 = scmp.eq.s32.totalorder %s18, 0
      %p127 = por %p125, %p126
      %p128 = scmp.ne.s32.totalorder %s120, %s122
      %p129 = scmp.eq.s32.totalorder %s23, 1
      %p130 = por %p128, %p129
      %p131 = scmp.ne.s32.totalorder %s122, %s123
      %p132 = scmp.eq.s32.totalorder %s23, 0
      %p133 = por %p131, %p132
      %p134 = scmp.ne.s32.totalorder %s122, %s123
      %p135 = scmp.eq.s32.totalorder %s24, 1
      %p136 = por %p134, %p135
      %p138 = scmp.ne.s32.totalorder %s123, %s137
      %p139 = scmp.eq.s32.totalorder %s24, 0
      %p140 = por %p138, %p139
      %s141 = ssub.s32 %s18, %s25
      %p142 = scmp.eq.s32.totalorder %s141, 0
      %s144 = sadd.s32 %s143, 1
      %s145 = scalar_select %p142, %s143, %s144
      %p148 = pneg %p142
      %p149 = scmp.eq.s32.totalorder %s18, 1
      %p150 = por %p148, %p149
      %p151 = scmp.ne.s32.totalorder %s143, %s146
      %p152 = scmp.eq.s32.totalorder %s18, 0
      %p153 = por %p151, %p152
      %p154 = scmp.ne.s32.totalorder %s143, %s146
      %p155 = scmp.eq.s32.totalorder %s23, 1
      %p156 = por %p154, %p155
      %p157 = scmp.ne.s32.totalorder %s146, %s147
      %p158 = scmp.eq.s32.totalorder %s23, 0
      %p159 = por %p157, %p158
      %p160 = scmp.ne.s32.totalorder %s146, %s147
      %p161 = scmp.eq.s32.totalorder %s24, 1
      %p162 = por %p160, %p161
      %p164 = scmp.ne.s32.totalorder %s147, %s163
      %p165 = scmp.eq.s32.totalorder %s24, 0
      %p166 = por %p164, %p165
      %p167 = scmp.le.s32.totalorder 1, %s18
      %p168 = scmp.lt.s32.totalorder %s18, 3
      %p169 = pnand %p167, %p168
      %p170 = pneg %p169
      // Predicated region
      $region9: #{tpu_custom_call.1} parent=5 // pred_check
        _
      $region10: #{tpu_custom_call.1} parent=5 // pred_check_branch
        %172 = sbr.rel (%p169) target = $region12
      $region11: #{tpu_custom_call.1} parent=5 // pred_region
        %s173 = ssub.s32 %s18, 1
        // Predicated region
        $region13: #{tpu_custom_call.1} parent=11 // pred_check
          %p174 = pneg %p65
        $region14: #{tpu_custom_call.1} parent=11 // pred_check_branch
          %176 = sbr.rel (%p174) target = $region16
        $region15: #{tpu_custom_call.1} parent=11 // pred_region
          %s178 = ssub.s32 8192, 8192
          %179 = vsyncadd [#allocation6], %s178
          %s180 = sshll.u32 [#allocation5], 4
          %s181 = int_to_ptr.vmem [resolvable:$true] %s180
          %186 = dma.hbm_to_vmem [thread:$0]  %s1, 8192, %s181, [#allocation6], 512, 512, 32
        $region16: #{tpu_custom_call.1} parent=11 // pred_fallthru
          _
        // Predicated region
        $region17: #{tpu_custom_call.1} parent=11 // pred_check
          %p187 = pneg %p112
        $region18: #{tpu_custom_call.1} parent=11 // pred_check_branch
          %189 = sbr.rel (%p187) target = $region20
        $region19: #{tpu_custom_call.1} parent=11 // pred_region
          %s191 = ssub.s32 1024, 1024
          %192 = vsyncadd [#allocation6], %s191
          %s193 = sshll.u32 [#allocation8], 4
          %s194 = int_to_ptr.vmem [resolvable:$true] %s193
          %199 = dma.hbm_to_vmem [thread:$0]  %s3, 1024, %s194, [#allocation6], 64, 64, 4
        $region20: #{tpu_custom_call.1} parent=11 // pred_fallthru
          _
        // Predicated region
        $region21: #{tpu_custom_call.1} parent=11 // pred_check
          %p200 = pneg %p133
        $region22: #{tpu_custom_call.1} parent=11 // pred_check_branch
          %202 = sbr.rel (%p200) target = $region24
        $region23: #{tpu_custom_call.1} parent=11 // pred_region
          _
        $region24: #{tpu_custom_call.1} parent=11 // pred_fallthru
          _
      $region12: #{tpu_custom_call.1} parent=5 // pred_fallthru
        _
      %p203 = scmp.lt.s32.totalorder %s18, 2
      // Predicated region
      $region25: #{tpu_custom_call.1} parent=5 // pred_check
        %p204 = pneg %p203
      $region26: #{tpu_custom_call.1} parent=5 // pred_check_branch
        %206 = sbr.rel (%p204) target = $region28
      $region27: #{tpu_custom_call.1} parent=5 // pred_region
        // Predicated region
        $region29: #{tpu_custom_call.1} parent=27 // pred_check
          %p207 = pneg %p38
        $region30: #{tpu_custom_call.1} parent=27 // pred_check_branch
          %209 = sbr.rel (%p207) target = $region32
        $region31: #{tpu_custom_call.1} parent=27 // pred_region
          %s210 = sand.u32 %s18, 1
          %s211 = scalar_lea.sflag [#allocation3], %s210
          %s212 = sand.u32 %s28, 1
          %s213 = smul.addr %s212, 4
          %s214 = scalar_lea.vmem [#allocation2], %s213
          %s216 = ssub.s32 64, 64
          %217 = vsyncadd %s211, %s216
          %s218 = smul.addr %s18, 64
          %s219 = scalar_lea.hbm %s0, %s218
          %s221 = sshll.u32 %s214, 4
          %s222 = int_to_ptr.vmem [resolvable:$true] %s221
          %224 = dma.hbm_to_vmem [thread:$0]  %s219, 64, %s222, %s211
        $region32: #{tpu_custom_call.1} parent=27 // pred_fallthru
          _
        // Predicated region
        $region33: #{tpu_custom_call.1} parent=27 // pred_check
          %p225 = pneg %p85
        $region34: #{tpu_custom_call.1} parent=27 // pred_check_branch
          %227 = sbr.rel (%p225) target = $region36
        $region35: #{tpu_custom_call.1} parent=27 // pred_region
          %s228 = sand.u32 %s18, 1
          %s229 = scalar_lea.sflag [#allocation3], %s228
          %s230 = sand.u32 %s75, 1
          %s231 = smul.addr %s230, 32
          %s232 = scalar_lea.vmem [#allocation7], %s231
          %s234 = ssub.s32 512, 512
          %235 = vsyncadd %s229, %s234
          %s236 = smul.addr %s18, 8
          %s237 = smul.addr %s236, 64
          %s238 = scalar_lea.hbm %s2, %s237
          %s240 = sshll.u32 %s232, 4
          %s241 = int_to_ptr.vmem [resolvable:$true] %s240
          %243 = dma.hbm_to_vmem [thread:$0]  %s238, 512, %s241, %s229
        $region36: #{tpu_custom_call.1} parent=27 // pred_fallthru
          _
      $region28: #{tpu_custom_call.1} parent=5 // pred_fallthru
        _
      %p244 = scmp.le.s32.totalorder 1, %s18
      %p245 = scmp.lt.s32.totalorder %s18, 3
      %p246 = pnand %p244, %p245
      %p247 = pneg %p246
      // Predicated region
      $region37: #{tpu_custom_call.1} parent=5 // pred_check
        _
      $region38: #{tpu_custom_call.1} parent=5 // pred_check_branch
        %249 = sbr.rel (%p246) target = $region40
      $region39: #{tpu_custom_call.1} parent=5 // pred_region
        %s250 = ssub.s32 %s18, 1
        %s251 = sand.u32 %s23, 1
        %s252 = scalar_lea.sflag [#allocation3], %s251
        %s253 = sand.u32 %s31, 1
        %s254 = smul.addr %s253, 4
        %s255 = scalar_lea.vmem [#allocation2], %s254
        // Predicated region
        $region41: #{tpu_custom_call.1} parent=39 // pred_check
          %p256 = pneg %p44
        $region42: #{tpu_custom_call.1} parent=39 // pred_check_branch
          %258 = sbr.rel (%p256) target = $region44
        $region43: #{tpu_custom_call.1} parent=39 // pred_region
          %259 = dma.done %s252, 64
        $region44: #{tpu_custom_call.1} parent=39 // pred_fallthru
          _
        // Predicated region
        $region45: #{tpu_custom_call.1} parent=39 // pred_check
          %p260 = pneg %p65
        $region46: #{tpu_custom_call.1} parent=39 // pred_check_branch
          %262 = sbr.rel (%p260) target = $region48
        $region47: #{tpu_custom_call.1} parent=39 // pred_region
          %263 = dma.done [#allocation6], 8192
        $region48: #{tpu_custom_call.1} parent=39 // pred_fallthru
          _
        %s264 = sand.u32 %s23, 1
        %s265 = scalar_lea.sflag [#allocation3], %s264
        %s266 = sand.u32 %s78, 1
        %s267 = smul.addr %s266, 32
        %s268 = scalar_lea.vmem [#allocation7], %s267
        // Predicated region
        $region49: #{tpu_custom_call.1} parent=39 // pred_check
          %p269 = pneg %p91
        $region50: #{tpu_custom_call.1} parent=39 // pred_check_branch
          %271 = sbr.rel (%p269) target = $region52
        $region51: #{tpu_custom_call.1} parent=39 // pred_region
          %272 = dma.done %s265, 512
        $region52: #{tpu_custom_call.1} parent=39 // pred_fallthru
          _
        // Predicated region
        $region53: #{tpu_custom_call.1} parent=39 // pred_check
          %p273 = pneg %p112
        $region54: #{tpu_custom_call.1} parent=39 // pred_check_branch
          %275 = sbr.rel (%p273) target = $region56
        $region55: #{tpu_custom_call.1} parent=39 // pred_region
          %276 = dma.done [#allocation6], 1024
        $region56: #{tpu_custom_call.1} parent=39 // pred_fallthru
          _
        %s277 = sand.u32 %s23, 1
        %s278 = scalar_lea.sflag [#allocation3], %s277
        %s279 = sand.u32 %s31, 1
        %s280 = smul.addr %s279, 4
        %s281 = scalar_lea.vmem [#allocation2], %s280
        %p282 = pneg %p44
        %p283 = pneg %p41
        %p284 = pneg %p65
        %p285 = pneg %p62
        %s286 = sand.u32 %s23, 1
        %s287 = scalar_lea.sflag [#allocation3], %s286
        %s288 = sand.u32 %s78, 1
        %s289 = smul.addr %s288, 32
        %s290 = scalar_lea.vmem [#allocation7], %s289
        %p291 = pneg %p91
        %p292 = pneg %p88
        %p293 = pneg %p112
        %p294 = pneg %p109
        %p295 = pneg %p133
        %p296 = pneg %p130
        %p297 = pneg %p159
        %p298 = pneg %p156
        %s299 = sand.u32 %s146, 1
        %s300 = scalar_lea.sflag [#allocation4], %s299
        %s301 = sand.u32 %s146, 1
        %s302 = smul.addr %s301, 8
        %s303 = scalar_lea.vmem [#allocation9], %s302
        %v305 = vld [vmem:[%s255] sm:$0xf]
        %v306 = vld [vmem:[#allocation5] sm:$0xff]
        %v307 = vld [vmem:[#allocation5 + $0x8] sm:$0xff]
        %v308 = vld [vmem:[#allocation5 + $0x10] sm:$0xff]
        %v309 = vld [vmem:[#allocation5 + $0x18] sm:$0xff]
        %v310 = vld [vmem:[#allocation5 + $0x20] sm:$0xff]
        %v311 = vld [vmem:[#allocation5 + $0x28] sm:$0xff]
        %v312 = vld [vmem:[#allocation5 + $0x30] sm:$0xff]
        %v313 = vld [vmem:[#allocation5 + $0x38] sm:$0xff]
        %v314 = vld [vmem:[#allocation5 + $0x40] sm:$0xff]
        %v315 = vld [vmem:[#allocation5 + $0x48] sm:$0xff]
        %v316 = vld [vmem:[#allocation5 + $0x50] sm:$0xff]
        %v317 = vld [vmem:[#allocation5 + $0x58] sm:$0xff]
        %v318 = vld [vmem:[#allocation5 + $0x60] sm:$0xff]
        %v319 = vld [vmem:[#allocation5 + $0x68] sm:$0xff]
        %v320 = vld [vmem:[#allocation5 + $0x70] sm:$0xff]
        %v321 = vld [vmem:[#allocation5 + $0x78] sm:$0xff]
        %v322 = vld [vmem:[#allocation5 + $0x80] sm:$0xff]
        %v323 = vld [vmem:[#allocation5 + $0x88] sm:$0xff]
        %v324 = vld [vmem:[#allocation5 + $0x90] sm:$0xff]
        %v325 = vld [vmem:[#allocation5 + $0x98] sm:$0xff]
        %v326 = vld [vmem:[#allocation5 + $0xa0] sm:$0xff]
        %v327 = vld [vmem:[#allocation5 + $0xa8] sm:$0xff]
        %v328 = vld [vmem:[#allocation5 + $0xb0] sm:$0xff]
        %v329 = vld [vmem:[#allocation5 + $0xb8] sm:$0xff]
        %v330 = vld [vmem:[#allocation5 + $0xc0] sm:$0xff]
        %v331 = vld [vmem:[#allocation5 + $0xc8] sm:$0xff]
        %v332 = vld [vmem:[#allocation5 + $0xd0] sm:$0xff]
        %v333 = vld [vmem:[#allocation5 + $0xd8] sm:$0xff]
        %v334 = vld [vmem:[#allocation5 + $0xe0] sm:$0xff]
        %v335 = vld [vmem:[#allocation5 + $0xe8] sm:$0xff]
        %v336 = vld [vmem:[#allocation5 + $0xf0] sm:$0xff]
        %v337 = vld [vmem:[#allocation5 + $0xf8] sm:$0xff]
        %v338 = vld [vmem:[#allocation5 + $0x100] sm:$0xff]
        %v339 = vld [vmem:[#allocation5 + $0x108] sm:$0xff]
        %v340 = vld [vmem:[#allocation5 + $0x110] sm:$0xff]
        %v341 = vld [vmem:[#allocation5 + $0x118] sm:$0xff]
        %v342 = vld [vmem:[#allocation5 + $0x120] sm:$0xff]
        %v343 = vld [vmem:[#allocation5 + $0x128] sm:$0xff]
        %v344 = vld [vmem:[#allocation5 + $0x130] sm:$0xff]
        %v345 = vld [vmem:[#allocation5 + $0x138] sm:$0xff]
        %v346 = vld [vmem:[#allocation5 + $0x140] sm:$0xff]
        %v347 = vld [vmem:[#allocation5 + $0x148] sm:$0xff]
        %v348 = vld [vmem:[#allocation5 + $0x150] sm:$0xff]
        %v349 = vld [vmem:[#allocation5 + $0x158] sm:$0xff]
        %v350 = vld [vmem:[#allocation5 + $0x160] sm:$0xff]
        %v351 = vld [vmem:[#allocation5 + $0x168] sm:$0xff]
        %v352 = vld [vmem:[#allocation5 + $0x170] sm:$0xff]
        %v353 = vld [vmem:[#allocation5 + $0x178] sm:$0xff]
        %v354 = vld [vmem:[#allocation5 + $0x180] sm:$0xff]
        %v355 = vld [vmem:[#allocation5 + $0x188] sm:$0xff]
        %v356 = vld [vmem:[#allocation5 + $0x190] sm:$0xff]
        %v357 = vld [vmem:[#allocation5 + $0x198] sm:$0xff]
        %v358 = vld [vmem:[#allocation5 + $0x1a0] sm:$0xff]
        %v359 = vld [vmem:[#allocation5 + $0x1a8] sm:$0xff]
        %v360 = vld [vmem:[#allocation5 + $0x1b0] sm:$0xff]
        %v361 = vld [vmem:[#allocation5 + $0x1b8] sm:$0xff]
        %v362 = vld [vmem:[#allocation5 + $0x1c0] sm:$0xff]
        %v363 = vld [vmem:[#allocation5 + $0x1c8] sm:$0xff]
        %v364 = vld [vmem:[#allocation5 + $0x1d0] sm:$0xff]
        %v365 = vld [vmem:[#allocation5 + $0x1d8] sm:$0xff]
        %v366 = vld [vmem:[#allocation5 + $0x1e0] sm:$0xff]
        %v367 = vld [vmem:[#allocation5 + $0x1e8] sm:$0xff]
        %v368 = vld [vmem:[#allocation5 + $0x1f0] sm:$0xff]
        %v369 = vld [vmem:[#allocation5 + $0x1f8] sm:$0xff]
        %v434 = vunpack.c.l.b16 %v306
        %v435 = vunpack.c.h.b16 %v306
        %v436 = vunpack.c.l.b16 %v307
        %v437 = vunpack.c.h.b16 %v307
        %v438 = vunpack.c.l.b16 %v308
        %v439 = vunpack.c.h.b16 %v308
        %v440 = vunpack.c.l.b16 %v309
        %v441 = vunpack.c.h.b16 %v309
        %v442 = vunpack.c.l.b16 %v310
        %v443 = vunpack.c.h.b16 %v310
        %v444 = vunpack.c.l.b16 %v311
        %v445 = vunpack.c.h.b16 %v311
        %v446 = vunpack.c.l.b16 %v312
        %v447 = vunpack.c.h.b16 %v312
        %v448 = vunpack.c.l.b16 %v313
        %v449 = vunpack.c.h.b16 %v313
        %v450 = vunpack.c.l.b16 %v314
        %v451 = vunpack.c.h.b16 %v314
        %v452 = vunpack.c.l.b16 %v315
        %v453 = vunpack.c.h.b16 %v315
        %v454 = vunpack.c.l.b16 %v316
        %v455 = vunpack.c.h.b16 %v316
        %v456 = vunpack.c.l.b16 %v317
        %v457 = vunpack.c.h.b16 %v317
        %v458 = vunpack.c.l.b16 %v318
        %v459 = vunpack.c.h.b16 %v318
        %v460 = vunpack.c.l.b16 %v319
        %v461 = vunpack.c.h.b16 %v319
        %v462 = vunpack.c.l.b16 %v320
        %v463 = vunpack.c.h.b16 %v320
        %v464 = vunpack.c.l.b16 %v321
        %v465 = vunpack.c.h.b16 %v321
        %v466 = vunpack.c.l.b16 %v322
        %v467 = vunpack.c.h.b16 %v322
        %v468 = vunpack.c.l.b16 %v323
        %v469 = vunpack.c.h.b16 %v323
        %v470 = vunpack.c.l.b16 %v324
        %v471 = vunpack.c.h.b16 %v324
        %v472 = vunpack.c.l.b16 %v325
        %v473 = vunpack.c.h.b16 %v325
        %v474 = vunpack.c.l.b16 %v326
        %v475 = vunpack.c.h.b16 %v326
        %v476 = vunpack.c.l.b16 %v327
        %v477 = vunpack.c.h.b16 %v327
        %v478 = vunpack.c.l.b16 %v328
        %v479 = vunpack.c.h.b16 %v328
        %v480 = vunpack.c.l.b16 %v329
        %v481 = vunpack.c.h.b16 %v329
        %v482 = vunpack.c.l.b16 %v330
        %v483 = vunpack.c.h.b16 %v330
        %v484 = vunpack.c.l.b16 %v331
        %v485 = vunpack.c.h.b16 %v331
        %v486 = vunpack.c.l.b16 %v332
        %v487 = vunpack.c.h.b16 %v332
        %v488 = vunpack.c.l.b16 %v333
        %v489 = vunpack.c.h.b16 %v333
        %v490 = vunpack.c.l.b16 %v334
        %v491 = vunpack.c.h.b16 %v334
        %v492 = vunpack.c.l.b16 %v335
        %v493 = vunpack.c.h.b16 %v335
        %v494 = vunpack.c.l.b16 %v336
        %v495 = vunpack.c.h.b16 %v336
        %v496 = vunpack.c.l.b16 %v337
        %v497 = vunpack.c.h.b16 %v337
        %v498 = vunpack.c.l.b16 %v338
        %v499 = vunpack.c.h.b16 %v338
        %v500 = vunpack.c.l.b16 %v339
        %v501 = vunpack.c.h.b16 %v339
        %v502 = vunpack.c.l.b16 %v340
        %v503 = vunpack.c.h.b16 %v340
        %v504 = vunpack.c.l.b16 %v341
        %v505 = vunpack.c.h.b16 %v341
        %v506 = vunpack.c.l.b16 %v342
        %v507 = vunpack.c.h.b16 %v342
        %v508 = vunpack.c.l.b16 %v343
        %v509 = vunpack.c.h.b16 %v343
        %v510 = vunpack.c.l.b16 %v344
        %v511 = vunpack.c.h.b16 %v344
        %v512 = vunpack.c.l.b16 %v345
        %v513 = vunpack.c.h.b16 %v345
        %v514 = vunpack.c.l.b16 %v346
        %v515 = vunpack.c.h.b16 %v346
        %v516 = vunpack.c.l.b16 %v347
        %v517 = vunpack.c.h.b16 %v347
        %v518 = vunpack.c.l.b16 %v348
        %v519 = vunpack.c.h.b16 %v348
        %v520 = vunpack.c.l.b16 %v349
        %v521 = vunpack.c.h.b16 %v349
        %v522 = vunpack.c.l.b16 %v350
        %v523 = vunpack.c.h.b16 %v350
        %v524 = vunpack.c.l.b16 %v351
        %v525 = vunpack.c.h.b16 %v351
        %v526 = vunpack.c.l.b16 %v352
        %v527 = vunpack.c.h.b16 %v352
        %v528 = vunpack.c.l.b16 %v353
        %v529 = vunpack.c.h.b16 %v353
        %v530 = vunpack.c.l.b16 %v354
        %v531 = vunpack.c.h.b16 %v354
        %v532 = vunpack.c.l.b16 %v355
        %v533 = vunpack.c.h.b16 %v355
        %v534 = vunpack.c.l.b16 %v356
        %v535 = vunpack.c.h.b16 %v356
        %v536 = vunpack.c.l.b16 %v357
        %v537 = vunpack.c.h.b16 %v357
        %v538 = vunpack.c.l.b16 %v358
        %v539 = vunpack.c.h.b16 %v358
        %v540 = vunpack.c.l.b16 %v359
        %v541 = vunpack.c.h.b16 %v359
        %v542 = vunpack.c.l.b16 %v360
        %v543 = vunpack.c.h.b16 %v360
        %v544 = vunpack.c.l.b16 %v361
        %v545 = vunpack.c.h.b16 %v361
        %v546 = vunpack.c.l.b16 %v362
        %v547 = vunpack.c.h.b16 %v362
        %v548 = vunpack.c.l.b16 %v363
        %v549 = vunpack.c.h.b16 %v363
        %v550 = vunpack.c.l.b16 %v364
        %v551 = vunpack.c.h.b16 %v364
        %v552 = vunpack.c.l.b16 %v365
        %v553 = vunpack.c.h.b16 %v365
        %v554 = vunpack.c.l.b16 %v366
        %v555 = vunpack.c.h.b16 %v366
        %v556 = vunpack.c.l.b16 %v367
        %v557 = vunpack.c.h.b16 %v367
        %v558 = vunpack.c.l.b16 %v368
        %v559 = vunpack.c.h.b16 %v368
        %v560 = vunpack.c.l.b16 %v369
        %v561 = vunpack.c.h.b16 %v369
        %v562 = vpack.c.b16 %v442, %v434
        %v563 = vpack.c.b16 %v443, %v435
        %v564 = vpack.c.b16 %v444, %v436
        %v565 = vpack.c.b16 %v445, %v437
        %v566 = vpack.c.b16 %v446, %v438
        %v567 = vpack.c.b16 %v447, %v439
        %v568 = vpack.c.b16 %v448, %v440
        %v569 = vpack.c.b16 %v449, %v441
        %v570 = vpack.c.b16 %v458, %v450
        %v571 = vpack.c.b16 %v459, %v451
        %v572 = vpack.c.b16 %v460, %v452
        %v573 = vpack.c.b16 %v461, %v453
        %v574 = vpack.c.b16 %v462, %v454
        %v575 = vpack.c.b16 %v463, %v455
        %v576 = vpack.c.b16 %v464, %v456
        %v577 = vpack.c.b16 %v465, %v457
        %v578 = vpack.c.b16 %v474, %v466
        %v579 = vpack.c.b16 %v475, %v467
        %v580 = vpack.c.b16 %v476, %v468
        %v581 = vpack.c.b16 %v477, %v469
        %v582 = vpack.c.b16 %v478, %v470
        %v583 = vpack.c.b16 %v479, %v471
        %v584 = vpack.c.b16 %v480, %v472
        %v585 = vpack.c.b16 %v481, %v473
        %v586 = vpack.c.b16 %v490, %v482
        %v587 = vpack.c.b16 %v491, %v483
        %v588 = vpack.c.b16 %v492, %v484
        %v589 = vpack.c.b16 %v493, %v485
        %v590 = vpack.c.b16 %v494, %v486
        %v591 = vpack.c.b16 %v495, %v487
        %v592 = vpack.c.b16 %v496, %v488
        %v593 = vpack.c.b16 %v497, %v489
        %v594 = vpack.c.b16 %v506, %v498
        %v595 = vpack.c.b16 %v507, %v499
        %v596 = vpack.c.b16 %v508, %v500
        %v597 = vpack.c.b16 %v509, %v501
        %v598 = vpack.c.b16 %v510, %v502
        %v599 = vpack.c.b16 %v511, %v503
        %v600 = vpack.c.b16 %v512, %v504
        %v601 = vpack.c.b16 %v513, %v505
        %v602 = vpack.c.b16 %v522, %v514
        %v603 = vpack.c.b16 %v523, %v515
        %v604 = vpack.c.b16 %v524, %v516
        %v605 = vpack.c.b16 %v525, %v517
        %v606 = vpack.c.b16 %v526, %v518
        %v607 = vpack.c.b16 %v527, %v519
        %v608 = vpack.c.b16 %v528, %v520
        %v609 = vpack.c.b16 %v529, %v521
        %v610 = vpack.c.b16 %v538, %v530
        %v611 = vpack.c.b16 %v539, %v531
        %v612 = vpack.c.b16 %v540, %v532
        %v613 = vpack.c.b16 %v541, %v533
        %v614 = vpack.c.b16 %v542, %v534
        %v615 = vpack.c.b16 %v543, %v535
        %v616 = vpack.c.b16 %v544, %v536
        %v617 = vpack.c.b16 %v545, %v537
        %v618 = vpack.c.b16 %v554, %v546
        %v619 = vpack.c.b16 %v555, %v547
        %v620 = vpack.c.b16 %v556, %v548
        %v621 = vpack.c.b16 %v557, %v549
        %v622 = vpack.c.b16 %v558, %v550
        %v623 = vpack.c.b16 %v559, %v551
        %v624 = vpack.c.b16 %v560, %v552
        %v625 = vpack.c.b16 %v561, %v553
        %690 = vmatprep.subr.bf16.mxu0 %v563
        %691 = vmatpush1.bf16.msra.mxu0 %v562
        %692 = vmatprep.subr.bf16.mxu0 %v571
        %693 = vmatpush1.bf16.msra.mxu0 %v570
        %694 = vmatprep.subr.bf16.mxu0 %v579
        %695 = vmatpush1.bf16.msra.mxu0 %v578
        %696 = vmatprep.subr.bf16.mxu0 %v587
        %697 = vmatpush1.bf16.msra.mxu0 %v586
        %698 = vmatprep.subr.bf16.mxu0 %v595
        %699 = vmatpush1.bf16.msra.mxu0 %v594
        %700 = vmatprep.subr.bf16.mxu0 %v603
        %701 = vmatpush1.bf16.msra.mxu0 %v602
        %702 = vmatprep.subr.bf16.mxu0 %v611
        %703 = vmatpush1.bf16.msra.mxu0 %v610
        %704 = vmatprep.subr.bf16.mxu0 %v619
        %705 = vmatpush1.bf16.msra.mxu0 %v618
        %706 = vmatprep.subr.bf16.mxu0 0
        %707 = vmatpush1.bf16.msra.mxu0 0
        %708 = vmatprep.subr.bf16.mxu0 0
        %709 = vmatpush1.bf16.msra.mxu0 0
        %710 = vmatprep.subr.bf16.mxu0 0
        %711 = vmatpush1.bf16.msra.mxu0 0
        %712 = vmatprep.subr.bf16.mxu0 0
        %713 = vmatpush1.bf16.msra.mxu0 0
        %714 = vmatprep.subr.bf16.mxu0 0
        %715 = vmatpush1.bf16.msra.mxu0 0
        %716 = vmatprep.subr.bf16.mxu0 0
        %717 = vmatpush1.bf16.msra.mxu0 0
        %718 = vmatprep.subr.bf16.mxu0 0
        %719 = vmatpush1.bf16.msra.mxu0 0
        %720 = vmatprep.subr.bf16.mxu0 0
        %721 = vmatpush1.bf16.msra.mxu0 0
        %722 = vmatprep.mubr.bf16.mxu0 0
        %723 = vmatmul.mubr.bf16.gmra.mrb[0].mxu0 %v305
        %v724 = vpop.f32.mrb[0].mxu0
        %v725 = vadd.f32 0.0, %v724
        %v726 = vpop.f32.mrb[0].mxu0
        %v727 = vadd.f32 0.0, %v726
        %v728 = vpop.f32.mrb[0].mxu0
        %v729 = vpop.f32.mrb[0].mxu0
        %730 = vdwg.mxu0
        %731 = vmatprep.subr.bf16.mxu0 %v565
        %732 = vmatpush1.bf16.msra.mxu0 %v564
        %733 = vmatprep.subr.bf16.mxu0 %v573
        %734 = vmatpush1.bf16.msra.mxu0 %v572
        %735 = vmatprep.subr.bf16.mxu0 %v581
        %736 = vmatpush1.bf16.msra.mxu0 %v580
        %737 = vmatprep.subr.bf16.mxu0 %v589
        %738 = vmatpush1.bf16.msra.mxu0 %v588
        %739 = vmatprep.subr.bf16.mxu0 %v597
        %740 = vmatpush1.bf16.msra.mxu0 %v596
        %741 = vmatprep.subr.bf16.mxu0 %v605
        %742 = vmatpush1.bf16.msra.mxu0 %v604
        %743 = vmatprep.subr.bf16.mxu0 %v613
        %744 = vmatpush1.bf16.msra.mxu0 %v612
        %745 = vmatprep.subr.bf16.mxu0 %v621
        %746 = vmatpush1.bf16.msra.mxu0 %v620
        %747 = vmatprep.subr.bf16.mxu0 0
        %748 = vmatpush1.bf16.msra.mxu0 0
        %749 = vmatprep.subr.bf16.mxu0 0
        %750 = vmatpush1.bf16.msra.mxu0 0
        %751 = vmatprep.subr.bf16.mxu0 0
        %752 = vmatpush1.bf16.msra.mxu0 0
        %753 = vmatprep.subr.bf16.mxu0 0
        %754 = vmatpush1.bf16.msra.mxu0 0
        %755 = vmatprep.subr.bf16.mxu0 0
        %756 = vmatpush1.bf16.msra.mxu0 0
        %757 = vmatprep.subr.bf16.mxu0 0
        %758 = vmatpush1.bf16.msra.mxu0 0
        %759 = vmatprep.subr.bf16.mxu0 0
        %760 = vmatpush1.bf16.msra.mxu0 0
        %761 = vmatprep.subr.bf16.mxu0 0
        %762 = vmatpush1.bf16.msra.mxu0 0
        %763 = vmatprep.mubr.bf16.mxu0 0
        %764 = vmatmul.mubr.bf16.gmra.mrb[0].mxu0 %v305
        %v765 = vpop.f32.mrb[0].mxu0
        %v766 = vadd.f32 0.0, %v765
        %v767 = vpop.f32.mrb[0].mxu0
        %v768 = vadd.f32 0.0, %v767
        %v769 = vpop.f32.mrb[0].mxu0
        %v770 = vpop.f32.mrb[0].mxu0
        %771 = vdwg.mxu0
        %772 = vmatprep.subr.bf16.mxu0 %v567
        %773 = vmatpush1.bf16.msra.mxu0 %v566
        %774 = vmatprep.subr.bf16.mxu0 %v575
        %775 = vmatpush1.bf16.msra.mxu0 %v574
        %776 = vmatprep.subr.bf16.mxu0 %v583
        %777 = vmatpush1.bf16.msra.mxu0 %v582
        %778 = vmatprep.subr.bf16.mxu0 %v591
        %779 = vmatpush1.bf16.msra.mxu0 %v590
        %780 = vmatprep.subr.bf16.mxu0 %v599
        %781 = vmatpush1.bf16.msra.mxu0 %v598
        %782 = vmatprep.subr.bf16.mxu0 %v607
        %783 = vmatpush1.bf16.msra.mxu0 %v606
        %784 = vmatprep.subr.bf16.mxu0 %v615
        %785 = vmatpush1.bf16.msra.mxu0 %v614
        %786 = vmatprep.subr.bf16.mxu0 %v623
        %787 = vmatpush1.bf16.msra.mxu0 %v622
        %788 = vmatprep.subr.bf16.mxu0 0
        %789 = vmatpush1.bf16.msra.mxu0 0
        %790 = vmatprep.subr.bf16.mxu0 0
        %791 = vmatpush1.bf16.msra.mxu0 0
        %792 = vmatprep.subr.bf16.mxu0 0
        %793 = vmatpush1.bf16.msra.mxu0 0
        %794 = vmatprep.subr.bf16.mxu0 0
        %795 = vmatpush1.bf16.msra.mxu0 0
        %796 = vmatprep.subr.bf16.mxu0 0
        %797 = vmatpush1.bf16.msra.mxu0 0
        %798 = vmatprep.subr.bf16.mxu0 0
        %799 = vmatpush1.bf16.msra.mxu0 0
        %800 = vmatprep.subr.bf16.mxu0 0
        %801 = vmatpush1.bf16.msra.mxu0 0
        %802 = vmatprep.subr.bf16.mxu0 0
        %803 = vmatpush1.bf16.msra.mxu0 0
        %804 = vmatprep.mubr.bf16.mxu0 0
        %805 = vmatmul.mubr.bf16.gmra.mrb[0].mxu0 %v305
        %v806 = vpop.f32.mrb[0].mxu0
        %v807 = vadd.f32 0.0, %v806
        %v808 = vpop.f32.mrb[0].mxu0
        %v809 = vadd.f32 0.0, %v808
        %v810 = vpop.f32.mrb[0].mxu0
        %v811 = vpop.f32.mrb[0].mxu0
        %812 = vdwg.mxu0
        %813 = vmatprep.subr.bf16.mxu0 %v569
        %814 = vmatpush1.bf16.msra.mxu0 %v568
        %815 = vmatprep.subr.bf16.mxu0 %v577
        %816 = vmatpush1.bf16.msra.mxu0 %v576
        %817 = vmatprep.subr.bf16.mxu0 %v585
        %818 = vmatpush1.bf16.msra.mxu0 %v584
        %819 = vmatprep.subr.bf16.mxu0 %v593
        %820 = vmatpush1.bf16.msra.mxu0 %v592
        %821 = vmatprep.subr.bf16.mxu0 %v601
        %822 = vmatpush1.bf16.msra.mxu0 %v600
        %823 = vmatprep.subr.bf16.mxu0 %v609
        %824 = vmatpush1.bf16.msra.mxu0 %v608
        %825 = vmatprep.subr.bf16.mxu0 %v617
        %826 = vmatpush1.bf16.msra.mxu0 %v616
        %827 = vmatprep.subr.bf16.mxu0 %v625
        %828 = vmatpush1.bf16.msra.mxu0 %v624
        %829 = vmatprep.subr.bf16.mxu0 0
        %830 = vmatpush1.bf16.msra.mxu0 0
        %831 = vmatprep.subr.bf16.mxu0 0
        %832 = vmatpush1.bf16.msra.mxu0 0
        %833 = vmatprep.subr.bf16.mxu0 0
        %834 = vmatpush1.bf16.msra.mxu0 0
        %835 = vmatprep.subr.bf16.mxu0 0
        %836 = vmatpush1.bf16.msra.mxu0 0
        %837 = vmatprep.subr.bf16.mxu0 0
        %838 = vmatpush1.bf16.msra.mxu0 0
        %839 = vmatprep.subr.bf16.mxu0 0
        %840 = vmatpush1.bf16.msra.mxu0 0
        %841 = vmatprep.subr.bf16.mxu0 0
        %842 = vmatpush1.bf16.msra.mxu0 0
        %843 = vmatprep.subr.bf16.mxu0 0
        %844 = vmatpush1.bf16.msra.mxu0 0
        %845 = vmatprep.mubr.bf16.mxu0 0
        %846 = vmatmul.mubr.bf16.gmra.mrb[0].mxu0 %v305
        %v847 = vpop.f32.mrb[0].mxu0
        %v848 = vadd.f32 0.0, %v847
        %v849 = vpop.f32.mrb[0].mxu0
        %v850 = vadd.f32 0.0, %v849
        %v851 = vpop.f32.mrb[0].mxu0
        %v852 = vpop.f32.mrb[0].mxu0
        %853 = vdwg.mxu0
        %v854 = vmul.f32 %v725, 2.0
        %v855 = vmul.f32 %v727, 2.0
        %v856 = vmul.f32 %v766, 2.0
        %v857 = vmul.f32 %v768, 2.0
        %v858 = vmul.f32 %v807, 2.0
        %v859 = vmul.f32 %v809, 2.0
        %v860 = vmul.f32 %v848, 2.0
        %v861 = vmul.f32 %v850, 2.0
        %v862 = vld [vmem:[%s268] sm:$0xff]
        %v863 = vld [vmem:[%s268 + $0x8] sm:$0xff]
        %v864 = vld [vmem:[%s268 + $0x10] sm:$0xff]
        %v865 = vld [vmem:[%s268 + $0x18] sm:$0xff]
        %v866 = vunpack.c.l.bf16 %v862
        %v867 = vunpack.c.h.bf16 %v862
        %v868 = vunpack.c.l.bf16 %v863
        %v869 = vunpack.c.h.bf16 %v863
        %v870 = vunpack.c.l.bf16 %v864
        %v871 = vunpack.c.h.bf16 %v864
        %v872 = vunpack.c.l.bf16 %v865
        %v873 = vunpack.c.h.bf16 %v865
        %v874 = vadd.f32 %v854, %v866
        %v875 = vadd.f32 %v855, %v867
        %v876 = vadd.f32 %v856, %v868
        %v877 = vadd.f32 %v857, %v869
        %v878 = vadd.f32 %v858, %v870
        %v879 = vadd.f32 %v859, %v871
        %v880 = vadd.f32 %v860, %v872
        %v881 = vadd.f32 %v861, %v873
        %v882 = vmax.f32 %v874, %v875
        %v883 = vmax.f32 %v882, %v876
        %v884 = vmax.f32 %v883, %v877
        %v885 = vmax.f32 %v884, %v878
        %v886 = vmax.f32 %v885, %v879
        %v887 = vmax.f32 %v886, %v880
        %v888 = vmax.f32 %v887, %v881
        %v889 = vsub.f32 %v874, %v888
        %v890 = vmul.f32 %v889, 1.442695
        %v891 = vpow.pop %v890
        %v892 = vadd.f32 %v891, 0.0
        %v893 = vmul.f32 %v891, -1.0
        %v894 = vadd.f32 %v893, 0.0
        %v895 = vsub.f32 %v875, %v888
        %v896 = vmul.f32 %v895, 1.442695
        %v897 = vpow.pop %v896
        %v898 = vadd.f32 %v892, %v897
        %v899 = vmul.f32 %v897, -0.71428573
        %v900 = vadd.f32 %v894, %v899
        %v901 = vsub.f32 %v876, %v888
        %v902 = vmul.f32 %v901, 1.442695
        %v903 = vpow.pop %v902
        %v904 = vadd.f32 %v898, %v903
        %v905 = vmul.f32 %v903, -0.42857143
        %v906 = vadd.f32 %v900, %v905
        %v907 = vsub.f32 %v877, %v888
        %v908 = vmul.f32 %v907, 1.442695
        %v909 = vpow.pop %v908
        %v910 = vadd.f32 %v904, %v909
        %v911 = vmul.f32 %v909, -0.14285715
        %v912 = vadd.f32 %v906, %v911
        %v913 = vsub.f32 %v878, %v888
        %v914 = vmul.f32 %v913, 1.442695
        %v915 = vpow.pop %v914
        %v916 = vadd.f32 %v910, %v915
        %v917 = vmul.f32 %v915, 0.14285715
        %v918 = vadd.f32 %v912, %v917
        %v919 = vsub.f32 %v879, %v888
        %v920 = vmul.f32 %v919, 1.442695
        %v921 = vpow.pop %v920
        %v922 = vadd.f32 %v916, %v921
        %v923 = vmul.f32 %v921, 0.42857143
        %v924 = vadd.f32 %v918, %v923
        %v925 = vsub.f32 %v880, %v888
        %v926 = vmul.f32 %v925, 1.442695
        %v927 = vpow.pop %v926
        %v928 = vadd.f32 %v922, %v927
        %v929 = vmul.f32 %v927, 0.71428573
        %v930 = vadd.f32 %v924, %v929
        %v931 = vsub.f32 %v881, %v888
        %v932 = vmul.f32 %v931, 1.442695
        %v933 = vpow.pop %v932
        %v934 = vadd.f32 %v928, %v933
        %v935 = vadd.f32 %v930, %v933
        %v936 = vrcp.pop %v934
        %v937 = vmul.f32 %v935, %v936
        %v938 = vpack.c.bf16 %v937, %v937
        %v939 = vld [vmem:[#allocation8] sm:$0xf]
        %v940 = vld [vmem:[#allocation8 + $0x4] sm:$0xf]
        %v941 = vld [vmem:[#allocation8 + $0x8] sm:$0xf]
        %v942 = vld [vmem:[#allocation8 + $0xc] sm:$0xf]
        %v943 = vld [vmem:[#allocation8 + $0x10] sm:$0xf]
        %v944 = vld [vmem:[#allocation8 + $0x14] sm:$0xf]
        %v945 = vld [vmem:[#allocation8 + $0x18] sm:$0xf]
        %v946 = vld [vmem:[#allocation8 + $0x1c] sm:$0xf]
        %v947 = vld [vmem:[#allocation8 + $0x20] sm:$0xf]
        %v948 = vld [vmem:[#allocation8 + $0x24] sm:$0xf]
        %v949 = vld [vmem:[#allocation8 + $0x28] sm:$0xf]
        %v950 = vld [vmem:[#allocation8 + $0x2c] sm:$0xf]
        %v951 = vld [vmem:[#allocation8 + $0x30] sm:$0xf]
        %v952 = vld [vmem:[#allocation8 + $0x34] sm:$0xf]
        %v953 = vld [vmem:[#allocation8 + $0x38] sm:$0xf]
        %v954 = vld [vmem:[#allocation8 + $0x3c] sm:$0xf]
        %v955 = vld [vmem:[%s4] sm:$0x1]
        %v957 = vlaneseq
        %v958 = vshrl.u32 %v957, 7
        %v959 = vsub.s32 0, %v958
        %v960 = vrot.slane %v955, %v959
        %v978 = vunpack.c.l.b16 %v939
        %v979 = vunpack.c.l.b16 %v940
        %v980 = vunpack.c.l.b16 %v941
        %v981 = vunpack.c.l.b16 %v942
        %v982 = vunpack.c.l.b16 %v943
        %v983 = vunpack.c.l.b16 %v944
        %v984 = vunpack.c.l.b16 %v945
        %v985 = vunpack.c.l.b16 %v946
        %v986 = vunpack.c.l.b16 %v947
        %v987 = vunpack.c.l.b16 %v948
        %v988 = vunpack.c.l.b16 %v949
        %v989 = vunpack.c.l.b16 %v950
        %v990 = vunpack.c.l.b16 %v951
        %v991 = vunpack.c.l.b16 %v952
        %v992 = vunpack.c.l.b16 %v953
        %v993 = vunpack.c.l.b16 %v954
        %v994 = vpack.c.b16 %v979, %v978
        %v995 = vpack.c.b16 %v981, %v980
        %v996 = vpack.c.b16 %v983, %v982
        %v997 = vpack.c.b16 %v985, %v984
        %v998 = vpack.c.b16 %v987, %v986
        %v999 = vpack.c.b16 %v989, %v988
        %v1000 = vpack.c.b16 %v991, %v990
        %v1001 = vpack.c.b16 %v993, %v992
        %1010 = vmatprep.subr.bf16.mxu0 0
        %1011 = vmatpush1.bf16.msra.mxu0 %v994
        %1012 = vmatprep.subr.bf16.mxu0 0
        %1013 = vmatpush1.bf16.msra.mxu0 %v995
        %1014 = vmatprep.subr.bf16.mxu0 0
        %1015 = vmatpush1.bf16.msra.mxu0 %v996
        %1016 = vmatprep.subr.bf16.mxu0 0
        %1017 = vmatpush1.bf16.msra.mxu0 %v997
        %1018 = vmatprep.subr.bf16.mxu0 0
        %1019 = vmatpush1.bf16.msra.mxu0 %v998
        %1020 = vmatprep.subr.bf16.mxu0 0
        %1021 = vmatpush1.bf16.msra.mxu0 %v999
        %1022 = vmatprep.subr.bf16.mxu0 0
        %1023 = vmatpush1.bf16.msra.mxu0 %v1000
        %1024 = vmatprep.subr.bf16.mxu0 0
        %1025 = vmatpush1.bf16.msra.mxu0 %v1001
        %1026 = vmatprep.subr.bf16.mxu0 0
        %1027 = vmatpush1.bf16.msra.mxu0 0
        %1028 = vmatprep.subr.bf16.mxu0 0
        %1029 = vmatpush1.bf16.msra.mxu0 0
        %1030 = vmatprep.subr.bf16.mxu0 0
        %1031 = vmatpush1.bf16.msra.mxu0 0
        %1032 = vmatprep.subr.bf16.mxu0 0
        %1033 = vmatpush1.bf16.msra.mxu0 0
        %1034 = vmatprep.subr.bf16.mxu0 0
        %1035 = vmatpush1.bf16.msra.mxu0 0
        %1036 = vmatprep.subr.bf16.mxu0 0
        %1037 = vmatpush1.bf16.msra.mxu0 0
        %1038 = vmatprep.subr.bf16.mxu0 0
        %1039 = vmatpush1.bf16.msra.mxu0 0
        %1040 = vmatprep.subr.bf16.mxu0 0
        %1041 = vmatpush1.bf16.msra.mxu0 0
        %1042 = vmatprep.mubr.bf16.mxu0 0
        %1043 = vmatmul.mubr.bf16.gmra.mrb[0].mxu0 %v938
        %v1044 = vpop.f32.mrb[0].mxu0
        %v1045 = vadd.f32 %v960, %v1044
        %v1046 = vpop.f32.mrb[0].mxu0
        %v1047 = vpop.f32.mrb[0].mxu0
        %v1048 = vpop.f32.mrb[0].mxu0
        %1049 = vdwg.mxu0
        %v1050 = vmax.f32 %v1045, 0.0
        %1051 = vst [vmem:[%s303] sm:$0xff] %v1050
        %s1052 = sand.u32 %s146, 1
        %s1053 = scalar_lea.sflag [#allocation4], %s1052
        %s1054 = sand.u32 %s146, 1
        %s1055 = smul.addr %s1054, 8
        %s1056 = scalar_lea.vmem [#allocation9], %s1055
        // Predicated region
        $region57: #{tpu_custom_call.1} parent=39 // pred_check
          %p1057 = pneg %p156
        $region58: #{tpu_custom_call.1} parent=39 // pred_check_branch
          %1059 = sbr.rel (%p1057) target = $region60
        $region59: #{tpu_custom_call.1} parent=39 // pred_region
          %s1061 = ssub.s32 128, 128
          %1062 = vsyncadd %s1053, %s1061
          %s1063 = smul.addr %s23, 128
          %s1064 = scalar_lea.hbm %s5, %s1063
          %s1066 = sshll.u32 %s1056, 4
          %s1067 = int_to_ptr.vmem [resolvable:$true] %s1066
          %1069 = dma.vmem_to_hbm [thread:$0]  %s1067, 128, %s1064, %s1053
        $region60: #{tpu_custom_call.1} parent=39 // pred_fallthru
          _
      $region40: #{tpu_custom_call.1} parent=5 // pred_fallthru
        _
      %p1070 = scmp.le.s32.totalorder 2, %s18
      // Predicated region
      $region61: #{tpu_custom_call.1} parent=5 // pred_check
        %p1071 = pneg %p1070
      $region62: #{tpu_custom_call.1} parent=5 // pred_check_branch
        %1073 = sbr.rel (%p1071) target = $region64
      $region63: #{tpu_custom_call.1} parent=5 // pred_region
        %s1074 = ssub.s32 %s18, 2
        // Predicated region
        $region65: #{tpu_custom_call.1} parent=63 // pred_check
          %p1075 = pneg %p162
        $region66: #{tpu_custom_call.1} parent=63 // pred_check_branch
          %1077 = sbr.rel (%p1075) target = $region68
        $region67: #{tpu_custom_call.1} parent=63 // pred_region
          %s1078 = sand.u32 %s147, 1
          %s1079 = scalar_lea.sflag [#allocation4], %s1078
          %s1080 = sand.u32 %s147, 1
          %s1081 = smul.addr %s1080, 8
          %s1082 = scalar_lea.vmem [#allocation9], %s1081
          %1083 = dma.done %s1079, 128
        $region68: #{tpu_custom_call.1} parent=63 // pred_fallthru
          _
      $region64: #{tpu_custom_call.1} parent=5 // pred_fallthru
        _
    $region6: #{tpu_custom_call.1} parent=1 // loop_footer
      %s22 = sadd.s32 1, %s18
    $region7: #{tpu_custom_call.1} parent=1 // loop_footer_branch
      %17 = sbr.rel target = $region3
    $region8: #{tpu_custom_call.1} parent=1 // loop_exit
      _
    %1084 = vsyncpa [#allocation3], 1
    %s1085 = scalar_lea.sflag [#allocation3], 1
    %1086 = vsyncpa %s1085, 1
    %1087 = vsyncpa [#allocation6], 1
    %1088 = vsyncpa [#allocation4], 1
    %s1089 = scalar_lea.sflag [#allocation4], 1
    %1090 = vsyncpa %s1089, 1

// kernel: tpu_custom_call.1
$region0: #{tpu_custom_call.1}
  #allocation0 [shape = 'u32[]', space=smem, size = 0x4, offset = 0x4, fixed_abs, tag = 'smem constant byte address 0x4 - core index']
  #allocation1 [shape = 'u32[144,128]{1,0:T(1,128)}', space=vmem, size = 0x12000, scoped, tag = 'internal scratch']
  %s0 = inlined_call_operand.hbm [shape: bf16[16,128], index: 0, kind: input, shape index: {}]
  %s1 = inlined_call_operand.hbm [shape: bf16[128,1024], index: 1, kind: input, shape index: {}]
  %s2 = inlined_call_operand.hbm [shape: bf16[16,1024], index: 2, kind: input, shape index: {}]
  %s3 = inlined_call_operand.hbm [shape: bf16[128,128], index: 3, kind: input, shape index: {}]
  %s4 = inlined_call_operand.vmem [shape: f32[1,128], index: 4, kind: input, shape index: {}]
  %s5 = inlined_call_operand.hbm [shape: f32[16,128], index: 5, kind: output, shape index: {}]
  %s6 = sld [smem:[#allocation0]]
  $region69: #{tpu_custom_call.1} parent=0
    _
  %s8 = ssub.s32 1, %s6
  %s9 = scalar_select 0, %s8, %s6
  $region1: #{tpu_custom_call.1} parent=0
    #allocation2 [shape = 'u8[4096]{0}', space=vmem, size = 0x1000, scoped, tag = 'input window, operand 0']
    #allocation3 [shape = 's32[2]{0}', space=sflag, size = 0x8, scoped, tag = 'scoped memory for tpu_custom_call.1']
    #allocation4 [shape = 's32[2]{0}', space=sflag, size = 0x8, scoped, tag = 'scoped memory for tpu_custom_call.1']
    #allocation5 [shape = 'u8[262144]{0}', space=vmem, size = 0x40000, scoped, tag = 'input window, operand 1, single buffered']
    #allocation6 [shape = 's32[1]{0}', space=sflag, size = 0x4, scoped, tag = 'scoped memory for tpu_custom_call.1']
    #allocation7 [shape = 'u8[32768]{0}', space=vmem, size = 0x8000, scoped, tag = 'input window, operand 2']
    #allocation8 [shape = 'u8[32768]{0}', space=vmem, size = 0x8000, scoped, tag = 'input window, operand 3, single buffered']
    #allocation9 [shape = 'u8[8192]{0}', space=vmem, size = 0x2000, scoped, tag = 'output window, operand 0']
    %10 = vsyncpa [#allocation3], 0
    %s11 = scalar_lea.sflag [#allocation3], 1
    %12 = vsyncpa %s11, 0
    %13 = vsyncpa [#allocation6], 0
    %14 = vsyncpa [#allocation4], 0
    %s15 = scalar_lea.sflag [#allocation4], 1
    %16 = vsyncpa %s15, 0
    loop: start=0, step=1, limit=4
    $region2: #{tpu_custom_call.1} parent=1 // loop_pre_header
      _
    $region3: #{tpu_custom_call.1} parent=1 // loop_header
      %s18 = sphi 0, %s22
      %p19 = scmp.ge.s32.totalorder %s18, 4
      %s28 = sphi 0, %s30
      %s31 = sphi 0, %s28
      %s32 = sphi 0, %s31
      %s48 = sphi 0, %s32
      %s52 = sphi 0, %s52
      %s54 = sphi 0, %s52
      %s55 = sphi 0, %s54
      %s69 = sphi 0, %s55
      %s75 = sphi 0, %s77
      %s78 = sphi 0, %s75
      %s79 = sphi 0, %s78
      %s95 = sphi 0, %s79
      %s99 = sphi 0, %s99
      %s101 = sphi 0, %s99
      %s102 = sphi 0, %s101
      %s116 = sphi 0, %s102
      %s120 = sphi 0, %s120
      %s122 = sphi 0, %s120
      %s123 = sphi 0, %s122
      %s137 = sphi 0, %s123
      %s143 = sphi 0, %s145
      %s146 = sphi 0, %s143
      %s147 = sphi 0, %s146
      %s163 = sphi 0, %s147
    $region4: #{tpu_custom_call.1} parent=1 // loop_header_branch
      %21 = sbr.rel (%p19) target = $region8
    $region5: #{tpu_custom_call.1} parent=1 // loop_body
      %s23 = ssub.s32 %s18, 1
      %s24 = ssub.s32 %s18, 2
      %s25 = sadd.s32 %s18, 1
      %s26 = ssub.s32 %s18, %s25
      %p27 = scmp.eq.s32.totalorder %s26, 0
      %s29 = sadd.s32 %s28, 1
      %s30 = scalar_select %p27, %s28, %s29
      %p33 = pneg %p27
      %p34 = scmp.eq.s32.totalorder %s18, 1
      %p35 = por %p33, %p34
      %p36 = scmp.ne.s32.totalorder %s28, %s31
      %p37 = scmp.eq.s32.totalorder %s18, 0
      %p38 = por %p36, %p37
      %p39 = scmp.ne.s32.totalorder %s28, %s31
      %p40 = scmp.eq.s32.totalorder %s23, 1
      %p41 = por %p39, %p40
      %p42 = scmp.ne.s32.totalorder %s31, %s32
      %p43 = scmp.eq.s32.totalorder %s23, 0
      %p44 = por %p42, %p43
      %p45 = scmp.ne.s32.totalorder %s31, %s32
      %p46 = scmp.eq.s32.totalorder %s24, 1
      %p47 = por %p45, %p46
      %p49 = scmp.ne.s32.totalorder %s32, %s48
      %p50 = scmp.eq.s32.totalorder %s24, 0
      %p51 = por %p49, %p50
      %s53 = sadd.s32 %s52, 1
      %p56 = scmp.eq.s32.totalorder %s18, 1
      %p57 = scmp.ne.s32.totalorder %s52, %s54
      %p58 = scmp.eq.s32.totalorder %s18, 0
      %p59 = por %p57, %p58
      %p60 = scmp.ne.s32.totalorder %s52, %s54
      %p61 = scmp.eq.s32.totalorder %s23, 1
      %p62 = por %p60, %p61
      %p63 = scmp.ne.s32.totalorder %s54, %s55
      %p64 = scmp.eq.s32.totalorder %s23, 0
      %p65 = por %p63, %p64
      %p66 = scmp.ne.s32.totalorder %s54, %s55
      %p67 = scmp.eq.s32.totalorder %s24, 1
      %p68 = por %p66, %p67
      %p70 = scmp.ne.s32.totalorder %s55, %s69
      %p71 = scmp.eq.s32.totalorder %s24, 0
      %p72 = por %p70, %p71
      %s73 = ssub.s32 %s18, %s25
      %p74 = scmp.eq.s32.totalorder %s73, 0
      %s76 = sadd.s32 %s75, 1
      %s77 = scalar_select %p74, %s75, %s76
      %p80 = pneg %p74
      %p81 = scmp.eq.s32.totalorder %s18, 1
      %p82 = por %p80, %p81
      %p83 = scmp.ne.s32.totalorder %s75, %s78
      %p84 = scmp.eq.s32.totalorder %s18, 0
      %p85 = por %p83, %p84
      %p86 = scmp.ne.s32.totalorder %s75, %s78
      %p87 = scmp.eq.s32.totalorder %s23, 1
      %p88 = por %p86, %p87
      %p89 = scmp.ne.s32.totalorder %s78, %s79
      %p90 = scmp.eq.s32.totalorder %s23, 0
      %p91 = por %p89, %p90
      %p92 = scmp.ne.s32.totalorder %s78, %s79
      %p93 = scmp.eq.s32.totalorder %s24, 1
      %p94 = por %p92, %p93
      %p96 = scmp.ne.s32.totalorder %s79, %s95
      %p97 = scmp.eq.s32.totalorder %s24, 0
      %p98 = por %p96, %p97
      %s100 = sadd.s32 %s99, 1
      %p103 = scmp.eq.s32.totalorder %s18, 1
      %p104 = scmp.ne.s32.totalorder %s99, %s101
      %p105 = scmp.eq.s32.totalorder %s18, 0
      %p106 = por %p104, %p105
      %p107 = scmp.ne.s32.totalorder %s99, %s101
      %p108 = scmp.eq.s32.totalorder %s23, 1
      %p109 = por %p107, %p108
      %p110 = scmp.ne.s32.totalorder %s101, %s102
      %p111 = scmp.eq.s32.totalorder %s23, 0
      %p112 = por %p110, %p111
      %p113 = scmp.ne.s32.totalorder %s101, %s102
      %p114 = scmp.eq.s32.totalorder %s24, 1
      %p115 = por %p113, %p114
      %p117 = scmp.ne.s32.totalorder %s102, %s116
      %p118 = scmp.eq.s32.totalorder %s24, 0
      %p119 = por %p117, %p118
      %s121 = sadd.s32 %s120, 1
      %p124 = scmp.eq.s32.totalorder %s18, 1
      %p125 = scmp.ne.s32.totalorder %s120, %s122
      %p126 = scmp.eq.s32.totalorder %s18, 0
      %p127 = por %p125, %p126
      %p128 = scmp.ne.s32.totalorder %s120, %s122
      %p129 = scmp.eq.s32.totalorder %s23, 1
      %p130 = por %p128, %p129
      %p131 = scmp.ne.s32.totalorder %s122, %s123
      %p132 = scmp.eq.s32.totalorder %s23, 0
      %p133 = por %p131, %p132
      %p134 = scmp.ne.s32.totalorder %s122, %s123
      %p135 = scmp.eq.s32.totalorder %s24, 1
      %p136 = por %p134, %p135
      %p138 = scmp.ne.s32.totalorder %s123, %s137
      %p139 = scmp.eq.s32.totalorder %s24, 0
      %p140 = por %p138, %p139
      %s141 = ssub.s32 %s18, %s25
      %p142 = scmp.eq.s32.totalorder %s141, 0
      %s144 = sadd.s32 %s143, 1
      %s145 = scalar_select %p142, %s143, %s144
      %p148 = pneg %p142
      %p149 = scmp.eq.s32.totalorder %s18, 1
      %p150 = por %p148, %p149
      %p151 = scmp.ne.s32.totalorder %s143, %s146
      %p152 = scmp.eq.s32.totalorder %s18, 0
      %p153 = por %p151, %p152
      %p154 = scmp.ne.s32.totalorder %s143, %s146
      %p155 = scmp.eq.s32.totalorder %s23, 1
      %p156 = por %p154, %p155
      %p157 = scmp.ne.s32.totalorder %s146, %s147
      %p158 = scmp.eq.s32.totalorder %s23, 0
      %p159 = por %p157, %p158
      %p160 = scmp.ne.s32.totalorder %s146, %s147
      %p161 = scmp.eq.s32.totalorder %s24, 1
      %p162 = por %p160, %p161
      %p164 = scmp.ne.s32.totalorder %s147, %s163
      %p165 = scmp.eq.s32.totalorder %s24, 0
      %p166 = por %p164, %p165
      %p167 = scmp.le.s32.totalorder 1, %s18
      %p168 = scmp.lt.s32.totalorder %s18, 3
      %p169 = pnand %p167, %p168
      %p170 = pneg %p169
      // Predicated region
      $region9: #{tpu_custom_call.1} parent=5 // pred_check
        _
      $region10: #{tpu_custom_call.1} parent=5 // pred_check_branch
        %172 = sbr.rel (%p169) target = $region12
      $region11: #{tpu_custom_call.1} parent=5 // pred_region
        %s173 = ssub.s32 %s18, 1
        // Predicated region
        $region13: #{tpu_custom_call.1} parent=11 // pred_check
          %p174 = pneg %p65
        $region14: #{tpu_custom_call.1} parent=11 // pred_check_branch
          %176 = sbr.rel (%p174) target = $region16
        $region15: #{tpu_custom_call.1} parent=11 // pred_region
          %s178 = ssub.s32 8192, 8192
          %179 = vsyncadd [#allocation6], %s178
          %s180 = sshll.u32 [#allocation5], 4
          %s181 = int_to_ptr.vmem [resolvable:$true] %s180
          %186 = dma.hbm_to_vmem [thread:$0]  %s1, 8192, %s181, [#allocation6], 512, 512, 32
        $region16: #{tpu_custom_call.1} parent=11 // pred_fallthru
          _
        // Predicated region
        $region17: #{tpu_custom_call.1} parent=11 // pred_check
          %p187 = pneg %p112
        $region18: #{tpu_custom_call.1} parent=11 // pred_check_branch
          %189 = sbr.rel (%p187) target = $region20
        $region19: #{tpu_custom_call.1} parent=11 // pred_region
          %s191 = ssub.s32 1024, 1024
          %192 = vsyncadd [#allocation6], %s191
          %s193 = sshll.u32 [#allocation8], 4
          %s194 = int_to_ptr.vmem [resolvable:$true] %s193
          %199 = dma.hbm_to_vmem [thread:$0]  %s3, 1024, %s194, [#allocation6], 64, 64, 4
        $region20: #{tpu_custom_call.1} parent=11 // pred_fallthru
          _
        // Predicated region
        $region21: #{tpu_custom_call.1} parent=11 // pred_check
          %p200 = pneg %p133
        $region22: #{tpu_custom_call.1} parent=11 // pred_check_branch
          %202 = sbr.rel (%p200) target = $region24
        $region23: #{tpu_custom_call.1} parent=11 // pred_region
          _
        $region24: #{tpu_custom_call.1} parent=11 // pred_fallthru
          _
      $region12: #{tpu_custom_call.1} parent=5 // pred_fallthru
        _
      %p203 = scmp.lt.s32.totalorder %s18, 2
      // Predicated region
      $region25: #{tpu_custom_call.1} parent=5 // pred_check
        %p204 = pneg %p203
      $region26: #{tpu_custom_call.1} parent=5 // pred_check_branch
        %206 = sbr.rel (%p204) target = $region28
      $region27: #{tpu_custom_call.1} parent=5 // pred_region
        // Predicated region
        $region29: #{tpu_custom_call.1} parent=27 // pred_check
          %p207 = pneg %p38
        $region30: #{tpu_custom_call.1} parent=27 // pred_check_branch
          %209 = sbr.rel (%p207) target = $region32
        $region31: #{tpu_custom_call.1} parent=27 // pred_region
          %s210 = sand.u32 %s18, 1
          %s211 = scalar_lea.sflag [#allocation3], %s210
          %s212 = sand.u32 %s28, 1
          %s213 = smul.addr %s212, 4
          %s214 = scalar_lea.vmem [#allocation2], %s213
          %s216 = ssub.s32 64, 64
          %217 = vsyncadd %s211, %s216
          %s218 = smul.addr %s18, 64
          %s219 = scalar_lea.hbm %s0, %s218
          %s221 = sshll.u32 %s214, 4
          %s222 = int_to_ptr.vmem [resolvable:$true] %s221
          %224 = dma.hbm_to_vmem [thread:$0]  %s219, 64, %s222, %s211
        $region32: #{tpu_custom_call.1} parent=27 // pred_fallthru
          _
        // Predicated region
        $region33: #{tpu_custom_call.1} parent=27 // pred_check
          %p225 = pneg %p85
        $region34: #{tpu_custom_call.1} parent=27 // pred_check_branch
          %227 = sbr.rel (%p225) target = $region36
        $region35: #{tpu_custom_call.1} parent=27 // pred_region
          %s228 = sand.u32 %s18, 1
          %s229 = scalar_lea.sflag [#allocation3], %s228
          %s230 = sand.u32 %s75, 1
          %s231 = smul.addr %s230, 32
          %s232 = scalar_lea.vmem [#allocation7], %s231
          %s234 = ssub.s32 512, 512
          %235 = vsyncadd %s229, %s234
          %s236 = smul.addr %s18, 8
          %s237 = smul.addr %s236, 64
          %s238 = scalar_lea.hbm %s2, %s237
          %s240 = sshll.u32 %s232, 4
          %s241 = int_to_ptr.vmem [resolvable:$true] %s240
          %243 = dma.hbm_to_vmem [thread:$0]  %s238, 512, %s241, %s229
        $region36: #{tpu_custom_call.1} parent=27 // pred_fallthru
          _
      $region28: #{tpu_custom_call.1} parent=5 // pred_fallthru
        _
      %p244 = scmp.le.s32.totalorder 1, %s18
      %p245 = scmp.lt.s32.totalorder %s18, 3
      %p246 = pnand %p244, %p245
      %p247 = pneg %p246
      // Predicated region
      $region37: #{tpu_custom_call.1} parent=5 // pred_check
        _
      $region38: #{tpu_custom_call.1} parent=5 // pred_check_branch
        %249 = sbr.rel (%p246) target = $region40
      $region39: #{tpu_custom_call.1} parent=5 // pred_region
        %s250 = ssub.s32 %s18, 1
        %s251 = sand.u32 %s23, 1
        %s252 = scalar_lea.sflag [#allocation3], %s251
        %s253 = sand.u32 %s31, 1
        %s254 = smul.addr %s253, 4
        %s255 = scalar_lea.vmem [#allocation2], %s254
        // Predicated region
        $region41: #{tpu_custom_call.1} parent=39 // pred_check
          %p256 = pneg %p44
        $region42: #{tpu_custom_call.1} parent=39 // pred_check_branch
          %258 = sbr.rel (%p256) target = $region44
        $region43: #{tpu_custom_call.1} parent=39 // pred_region
          %259 = dma.done %s252, 64
        $region44: #{tpu_custom_call.1} parent=39 // pred_fallthru
          _
        // Predicated region
        $region45: #{tpu_custom_call.1} parent=39 // pred_check
          %p260 = pneg %p65
        $region46: #{tpu_custom_call.1} parent=39 // pred_check_branch
          %262 = sbr.rel (%p260) target = $region48
        $region47: #{tpu_custom_call.1} parent=39 // pred_region
          %263 = dma.done [#allocation6], 8192
        $region48: #{tpu_custom_call.1} parent=39 // pred_fallthru
          _
        %s264 = sand.u32 %s23, 1
        %s265 = scalar_lea.sflag [#allocation3], %s264
        %s266 = sand.u32 %s78, 1
        %s267 = smul.addr %s266, 32
        %s268 = scalar_lea.vmem [#allocation7], %s267
        // Predicated region
        $region49: #{tpu_custom_call.1} parent=39 // pred_check
          %p269 = pneg %p91
        $region50: #{tpu_custom_call.1} parent=39 // pred_check_branch
          %271 = sbr.rel (%p269) target = $region52
        $region51: #{tpu_custom_call.1} parent=39 // pred_region
          %272 = dma.done %s265, 512
        $region52: #{tpu_custom_call.1} parent=39 // pred_fallthru
          _
        // Predicated region
        $region53: #{tpu_custom_call.1} parent=39 // pred_check
          %p273 = pneg %p112
        $region54: #{tpu_custom_call.1} parent=39 // pred_check_branch
          %275 = sbr.rel (%p273) target = $region56
        $region55: #{tpu_custom_call.1} parent=39 // pred_region
          %276 = dma.done [#allocation6], 1024
        $region56: #{tpu_custom_call.1} parent=39 // pred_fallthru
          _
        %s277 = sand.u32 %s23, 1
        %s278 = scalar_lea.sflag [#allocation3], %s277
        %s279 = sand.u32 %s31, 1
        %s280 = smul.addr %s279, 4
        %s281 = scalar_lea.vmem [#allocation2], %s280
        %p282 = pneg %p44
        %p283 = pneg %p41
        %p284 = pneg %p65
        %p285 = pneg %p62
        %s286 = sand.u32 %s23, 1
        %s287 = scalar_lea.sflag [#allocation3], %s286
        %s288 = sand.u32 %s78, 1
        %s289 = smul.addr %s288, 32
        %s290 = scalar_lea.vmem [#allocation7], %s289
        %p291 = pneg %p91
        %p292 = pneg %p88
        %p293 = pneg %p112
        %p294 = pneg %p109
        %p295 = pneg %p133
        %p296 = pneg %p130
        %p297 = pneg %p159
        %p298 = pneg %p156
        %s299 = sand.u32 %s146, 1
        %s300 = scalar_lea.sflag [#allocation4], %s299
        %s301 = sand.u32 %s146, 1
        %s302 = smul.addr %s301, 8
        %s303 = scalar_lea.vmem [#allocation9], %s302
        %v305 = vld [vmem:[%s255] sm:$0xf]
        %v306 = vld [vmem:[#allocation5] sm:$0xff]
        %v307 = vld [vmem:[#allocation5 + $0x8] sm:$0xff]
        %v308 = vld [vmem:[#allocation5 + $0x10] sm:$0xff]
        %v309 = vld [vmem:[#allocation5 + $0x18] sm:$0xff]
        %v310 = vld [vmem:[#allocation5 + $0x20] sm:$0xff]
        %v311 = vld [vmem:[#allocation5 + $0x28] sm:$0xff]
        %v312 = vld [vmem:[#allocation5 + $0x30] sm:$0xff]
        %v313 = vld [vmem:[#allocation5 + $0x38] sm:$0xff]
        %v314 = vld [vmem:[#allocation5 + $0x40] sm:$0xff]
        %v315 = vld [vmem:[#allocation5 + $0x48] sm:$0xff]
        %v316 = vld [vmem:[#allocation5 + $0x50] sm:$0xff]
        %v317 = vld [vmem:[#allocation5 + $0x58] sm:$0xff]
        %v318 = vld [vmem:[#allocation5 + $0x60] sm:$0xff]
        %v319 = vld [vmem:[#allocation5 + $0x68] sm:$0xff]
        %v320 = vld [vmem:[#allocation5 + $0x70] sm:$0xff]
        %v321 = vld [vmem:[#allocation5 + $0x78] sm:$0xff]
        %v322 = vld [vmem:[#allocation5 + $0x80] sm:$0xff]
        %v323 = vld [vmem:[#allocation5 + $0x88] sm:$0xff]
        %v324 = vld [vmem:[#allocation5 + $0x90] sm:$0xff]
        %v325 = vld [vmem:[#allocation5 + $0x98] sm:$0xff]
        %v326 = vld [vmem:[#allocation5 + $0xa0] sm:$0xff]
        %v327 = vld [vmem:[#allocation5 + $0xa8] sm:$0xff]
        %v328 = vld [vmem:[#allocation5 + $0xb0] sm:$0xff]
        %v329 = vld [vmem:[#allocation5 + $0xb8] sm:$0xff]
        %v330 = vld [vmem:[#allocation5 + $0xc0] sm:$0xff]
        %v331 = vld [vmem:[#allocation5 + $0xc8] sm:$0xff]
        %v332 = vld [vmem:[#allocation5 + $0xd0] sm:$0xff]
        %v333 = vld [vmem:[#allocation5 + $0xd8] sm:$0xff]
        %v334 = vld [vmem:[#allocation5 + $0xe0] sm:$0xff]
        %v335 = vld [vmem:[#allocation5 + $0xe8] sm:$0xff]
        %v336 = vld [vmem:[#allocation5 + $0xf0] sm:$0xff]
        %v337 = vld [vmem:[#allocation5 + $0xf8] sm:$0xff]
        %v338 = vld [vmem:[#allocation5 + $0x100] sm:$0xff]
        %v339 = vld [vmem:[#allocation5 + $0x108] sm:$0xff]
        %v340 = vld [vmem:[#allocation5 + $0x110] sm:$0xff]
        %v341 = vld [vmem:[#allocation5 + $0x118] sm:$0xff]
        %v342 = vld [vmem:[#allocation5 + $0x120] sm:$0xff]
        %v343 = vld [vmem:[#allocation5 + $0x128] sm:$0xff]
        %v344 = vld [vmem:[#allocation5 + $0x130] sm:$0xff]
        %v345 = vld [vmem:[#allocation5 + $0x138] sm:$0xff]
        %v346 = vld [vmem:[#allocation5 + $0x140] sm:$0xff]
        %v347 = vld [vmem:[#allocation5 + $0x148] sm:$0xff]
        %v348 = vld [vmem:[#allocation5 + $0x150] sm:$0xff]
        %v349 = vld [vmem:[#allocation5 + $0x158] sm:$0xff]
        %v350 = vld [vmem:[#allocation5 + $0x160] sm:$0xff]
        %v351 = vld [vmem:[#allocation5 + $0x168] sm:$0xff]
        %v352 = vld [vmem:[#allocation5 + $0x170] sm:$0xff]
        %v353 = vld [vmem:[#allocation5 + $0x178] sm:$0xff]
        %v354 = vld [vmem:[#allocation5 + $0x180] sm:$0xff]
        %v355 = vld [vmem:[#allocation5 + $0x188] sm:$0xff]
        %v356 = vld [vmem:[#allocation5 + $0x190] sm:$0xff]
        %v357 = vld [vmem:[#allocation5 + $0x198] sm:$0xff]
        %v358 = vld [vmem:[#allocation5 + $0x1a0] sm:$0xff]
        %v359 = vld [vmem:[#allocation5 + $0x1a8] sm:$0xff]
        %v360 = vld [vmem:[#allocation5 + $0x1b0] sm:$0xff]
        %v361 = vld [vmem:[#allocation5 + $0x1b8] sm:$0xff]
        %v362 = vld [vmem:[#allocation5 + $0x1c0] sm:$0xff]
        %v363 = vld [vmem:[#allocation5 + $0x1c8] sm:$0xff]
        %v364 = vld [vmem:[#allocation5 + $0x1d0] sm:$0xff]
        %v365 = vld [vmem:[#allocation5 + $0x1d8] sm:$0xff]
        %v366 = vld [vmem:[#allocation5 + $0x1e0] sm:$0xff]
        %v367 = vld [vmem:[#allocation5 + $0x1e8] sm:$0xff]
        %v368 = vld [vmem:[#allocation5 + $0x1f0] sm:$0xff]
        %v369 = vld [vmem:[#allocation5 + $0x1f8] sm:$0xff]
        %v434 = vunpack.c.l.b16 %v306
        %v435 = vunpack.c.h.b16 %v306
        %v436 = vunpack.c.l.b16 %v307
        %v437 = vunpack.c.h.b16 %v307
        %v438 = vunpack.c.l.b16 %v308
        %v439 = vunpack.c.h.b16 %v308
        %v440 = vunpack.c.l.b16 %v309
        %v441 = vunpack.c.h.b16 %v309
        %v442 = vunpack.c.l.b16 %v310
        %v443 = vunpack.c.h.b16 %v310
        %v444 = vunpack.c.l.b16 %v311
        %v445 = vunpack.c.h.b16 %v311
        %v446 = vunpack.c.l.b16 %v312
        %v447 = vunpack.c.h.b16 %v312
        %v448 = vunpack.c.l.b16 %v313
        %v449 = vunpack.c.h.b16 %v313
        %v450 = vunpack.c.l.b16 %v314
        %v451 = vunpack.c.h.b16 %v314
        %v452 = vunpack.c.l.b16 %v315
        %v453 = vunpack.c.h.b16 %v315
        %v454 = vunpack.c.l.b16 %v316
        %v455 = vunpack.c.h.b16 %v316
        %v456 = vunpack.c.l.b16 %v317
        %v457 = vunpack.c.h.b16 %v317
        %v458 = vunpack.c.l.b16 %v318
        %v459 = vunpack.c.h.b16 %v318
        %v460 = vunpack.c.l.b16 %v319
        %v461 = vunpack.c.h.b16 %v319
        %v462 = vunpack.c.l.b16 %v320
        %v463 = vunpack.c.h.b16 %v320
        %v464 = vunpack.c.l.b16 %v321
        %v465 = vunpack.c.h.b16 %v321
        %v466 = vunpack.c.l.b16 %v322
        %v467 = vunpack.c.h.b16 %v322
        %v468 = vunpack.c.l.b16 %v323
        %v469 = vunpack.c.h.b16 %v323
        %v470 = vunpack.c.l.b16 %v324
        %v471 = vunpack.c.h.b16 %v324
        %v472 = vunpack.c.l.b16 %v325
        %v473 = vunpack.c.h.b16 %v325
        %v474 = vunpack.c.l.b16 %v326
        %v475 = vunpack.c.h.b16 %v326
        %v476 = vunpack.c.l.b16 %v327
        %v477 = vunpack.c.h.b16 %v327
        %v478 = vunpack.c.l.b16 %v328
        %v479 = vunpack.c.h.b16 %v328
        %v480 = vunpack.c.l.b16 %v329
        %v481 = vunpack.c.h.b16 %v329
        %v482 = vunpack.c.l.b16 %v330
        %v483 = vunpack.c.h.b16 %v330
        %v484 = vunpack.c.l.b16 %v331
        %v485 = vunpack.c.h.b16 %v331
        %v486 = vunpack.c.l.b16 %v332
        %v487 = vunpack.c.h.b16 %v332
        %v488 = vunpack.c.l.b16 %v333
        %v489 = vunpack.c.h.b16 %v333
        %v490 = vunpack.c.l.b16 %v334
        %v491 = vunpack.c.h.b16 %v334
        %v492 = vunpack.c.l.b16 %v335
        %v493 = vunpack.c.h.b16 %v335
        %v494 = vunpack.c.l.b16 %v336
        %v495 = vunpack.c.h.b16 %v336
        %v496 = vunpack.c.l.b16 %v337
        %v497 = vunpack.c.h.b16 %v337
        %v498 = vunpack.c.l.b16 %v338
        %v499 = vunpack.c.h.b16 %v338
        %v500 = vunpack.c.l.b16 %v339
        %v501 = vunpack.c.h.b16 %v339
        %v502 = vunpack.c.l.b16 %v340
        %v503 = vunpack.c.h.b16 %v340
        %v504 = vunpack.c.l.b16 %v341
        %v505 = vunpack.c.h.b16 %v341
        %v506 = vunpack.c.l.b16 %v342
        %v507 = vunpack.c.h.b16 %v342
        %v508 = vunpack.c.l.b16 %v343
        %v509 = vunpack.c.h.b16 %v343
        %v510 = vunpack.c.l.b16 %v344
        %v511 = vunpack.c.h.b16 %v344
        %v512 = vunpack.c.l.b16 %v345
        %v513 = vunpack.c.h.b16 %v345
        %v514 = vunpack.c.l.b16 %v346
        %v515 = vunpack.c.h.b16 %v346
        %v516 = vunpack.c.l.b16 %v347
        %v517 = vunpack.c.h.b16 %v347
        %v518 = vunpack.c.l.b16 %v348
        %v519 = vunpack.c.h.b16 %v348
        %v520 = vunpack.c.l.b16 %v349
        %v521 = vunpack.c.h.b16 %v349
        %v522 = vunpack.c.l.b16 %v350
        %v523 = vunpack.c.h.b16 %v350
        %v524 = vunpack.c.l.b16 %v351
        %v525 = vunpack.c.h.b16 %v351
        %v526 = vunpack.c.l.b16 %v352
        %v527 = vunpack.c.h.b16 %v352
        %v528 = vunpack.c.l.b16 %v353
        %v529 = vunpack.c.h.b16 %v353
        %v530 = vunpack.c.l.b16 %v354
        %v531 = vunpack.c.h.b16 %v354
        %v532 = vunpack.c.l.b16 %v355
        %v533 = vunpack.c.h.b16 %v355
        %v534 = vunpack.c.l.b16 %v356
        %v535 = vunpack.c.h.b16 %v356
        %v536 = vunpack.c.l.b16 %v357
        %v537 = vunpack.c.h.b16 %v357
        %v538 = vunpack.c.l.b16 %v358
        %v539 = vunpack.c.h.b16 %v358
        %v540 = vunpack.c.l.b16 %v359
        %v541 = vunpack.c.h.b16 %v359
        %v542 = vunpack.c.l.b16 %v360
        %v543 = vunpack.c.h.b16 %v360
        %v544 = vunpack.c.l.b16 %v361
        %v545 = vunpack.c.h.b16 %v361
        %v546 = vunpack.c.l.b16 %v362
        %v547 = vunpack.c.h.b16 %v362
        %v548 = vunpack.c.l.b16 %v363
        %v549 = vunpack.c.h.b16 %v363
        %v550 = vunpack.c.l.b16 %v364
        %v551 = vunpack.c.h.b16 %v364
        %v552 = vunpack.c.l.b16 %v365
        %v553 = vunpack.c.h.b16 %v365
        %v554 = vunpack.c.l.b16 %v366
        %v555 = vunpack.c.h.b16 %v366
        %v556 = vunpack.c.l.b16 %v367
        %v557 = vunpack.c.h.b16 %v367
        %v558 = vunpack.c.l.b16 %v368
        %v559 = vunpack.c.h.b16 %v368
        %v560 = vunpack.c.l.b16 %v369
        %v561 = vunpack.c.h.b16 %v369
        %v562 = vpack.c.b16 %v442, %v434
        %v563 = vpack.c.b16 %v443, %v435
        %v564 = vpack.c.b16 %v444, %v436
        %v565 = vpack.c.b16 %v445, %v437
        %v566 = vpack.c.b16 %v446, %v438
        %v567 = vpack.c.b16 %v447, %v439
        %v568 = vpack.c.b16 %v448, %v440
        %v569 = vpack.c.b16 %v449, %v441
        %v570 = vpack.c.b16 %v458, %v450
        %v571 = vpack.c.b16 %v459, %v451
        %v572 = vpack.c.b16 %v460, %v452
        %v573 = vpack.c.b16 %v461, %v453
        %v574 = vpack.c.b16 %v462, %v454
        %v575 = vpack.c.b16 %v463, %v455
        %v576 = vpack.c.b16 %v464, %v456
        %v577 = vpack.c.b16 %v465, %v457
        %v578 = vpack.c.b16 %v474, %v466
        %v579 = vpack.c.b16 %v475, %v467
        %v580 = vpack.c.b16 %v476, %v468
        %v581 = vpack.c.b16 %v477, %v469
        %v582 = vpack.c.b16 %v478, %v470
        %v583 = vpack.c.b16 %v479, %v471
        %v584 = vpack.c.b16 %v480, %v472
        %v585 = vpack.c.b16 %v481, %v473
        %v586 = vpack.c.b16 %v490, %v482
        %v587 = vpack.c.b16 %v491, %v483
        %v588 = vpack.c.b16 %v492, %v484
        %v589 = vpack.c.b16 %v493, %v485
        %v590 = vpack.c.b16 %v494, %v486
        %v591 = vpack.c.b16 %v495, %v487
        %v592 = vpack.c.b16 %v496, %v488
        %v593 = vpack.c.b16 %v497, %v489
        %v594 = vpack.c.b16 %v506, %v498
        %v595 = vpack.c.b16 %v507, %v499
        %v596 = vpack.c.b16 %v508, %v500
        %v597 = vpack.c.b16 %v509, %v501
        %v598 = vpack.c.b16 %v510, %v502
        %v599 = vpack.c.b16 %v511, %v503
        %v600 = vpack.c.b16 %v512, %v504
        %v601 = vpack.c.b16 %v513, %v505
        %v602 = vpack.c.b16 %v522, %v514
        %v603 = vpack.c.b16 %v523, %v515
        %v604 = vpack.c.b16 %v524, %v516
        %v605 = vpack.c.b16 %v525, %v517
        %v606 = vpack.c.b16 %v526, %v518
        %v607 = vpack.c.b16 %v527, %v519
        %v608 = vpack.c.b16 %v528, %v520
        %v609 = vpack.c.b16 %v529, %v521
        %v610 = vpack.c.b16 %v538, %v530
        %v611 = vpack.c.b16 %v539, %v531
        %v612 = vpack.c.b16 %v540, %v532
        %v613 = vpack.c.b16 %v541, %v533
        %v614 = vpack.c.b16 %v542, %v534
        %v615 = vpack.c.b16 %v543, %v535
        %v616 = vpack.c.b16 %v544, %v536
        %v617 = vpack.c.b16 %v545, %v537
        %v618 = vpack.c.b16 %v554, %v546
        %v619 = vpack.c.b16 %v555, %v547
        %v620 = vpack.c.b16 %v556, %v548
        %v621 = vpack.c.b16 %v557, %v549
        %v622 = vpack.c.b16 %v558, %v550
        %v623 = vpack.c.b16 %v559, %v551
        %v624 = vpack.c.b16 %v560, %v552
        %v625 = vpack.c.b16 %v561, %v553
        %690 = vmatprep.subr.bf16.mxu0 %v563
        %691 = vmatpush1.bf16.msra.mxu0 %v562
        %692 = vmatprep.subr.bf16.mxu0 %v571
        %693 = vmatpush1.bf16.msra.mxu0 %v570
        %694 = vmatprep.subr.bf16.mxu0 %v579
        %695 = vmatpush1.bf16.msra.mxu0 %v578
        %696 = vmatprep.subr.bf16.mxu0 %v587
        %697 = vmatpush1.bf16.msra.mxu0 %v586
        %698 = vmatprep.subr.bf16.mxu0 %v595
        %699 = vmatpush1.bf16.msra.mxu0 %v594
        %700 = vmatprep.subr.bf16.mxu0 %v603
        %701 = vmatpush1.bf16.msra.mxu0 %v602
        %702 = vmatprep.subr.bf16.mxu0 %v611
        %703 = vmatpush1.bf16.msra.mxu0 %v610
        %704 = vmatprep.subr.bf16.mxu0 %v619
        %705 = vmatpush1.bf16.msra.mxu0 %v618
        %706 = vmatprep.subr.bf16.mxu0 0
        %707 = vmatpush1.bf16.msra.mxu0 0
        %708 = vmatprep.subr.bf16.mxu0 0
        %709 = vmatpush1.bf16.msra.mxu0 0
        %710 = vmatprep.subr.bf16.mxu0 0
        %711 = vmatpush1.bf16.msra.mxu0 0
        %712 = vmatprep.subr.bf16.mxu0 0
        %713 = vmatpush1.bf16.msra.mxu0 0
        %714 = vmatprep.subr.bf16.mxu0 0
        %715 = vmatpush1.bf16.msra.mxu0 0
        %716 = vmatprep.subr.bf16.mxu0 0
        %717 = vmatpush1.bf16.msra.mxu0 0
        %718 = vmatprep.subr.bf16.mxu0 0
        %719 = vmatpush1.bf16.msra.mxu0 0
        %720 = vmatprep.subr.bf16.mxu0 0
        %721 = vmatpush1.bf16.msra.mxu0 0
        %722 = vmatprep.mubr.bf16.mxu0 0
        %723 = vmatmul.mubr.bf16.gmra.mrb[0].mxu0 %v305
        %v724 = vpop.f32.mrb[0].mxu0
        %v725 = vadd.f32 0.0, %v724
        %v726 = vpop.f32.mrb[0].mxu0
        %v727 = vadd.f32 0.0, %v726
        %v728 = vpop.f32.mrb[0].mxu0
        %v729 = vpop.f32.mrb[0].mxu0
        %730 = vdwg.mxu0
        %731 = vmatprep.subr.bf16.mxu0 %v565
        %732 = vmatpush1.bf16.msra.mxu0 %v564
        %733 = vmatprep.subr.bf16.mxu0 %v573
        %734 = vmatpush1.bf16.msra.mxu0 %v572
        %735 = vmatprep.subr.bf16.mxu0 %v581
        %736 = vmatpush1.bf16.msra.mxu0 %v580
        %737 = vmatprep.subr.bf16.mxu0 %v589
        %738 = vmatpush1.bf16.msra.mxu0 %v588
        %739 = vmatprep.subr.bf16.mxu0 %v597
        %740 = vmatpush1.bf16.msra.mxu0 %v596
        %741 = vmatprep.subr.bf16.mxu0 %v605
        %742 = vmatpush1.bf16.msra.mxu0 %v604
        %743 = vmatprep.subr.bf16.mxu0 %v613
        %744 = vmatpush1.bf16.msra.mxu0 %v612
        %745 = vmatprep.subr.bf16.mxu0 %v621
        %746 = vmatpush1.bf16.msra.mxu0 %v620
        %747 = vmatprep.subr.bf16.mxu0 0
        %748 = vmatpush1.bf16.msra.mxu0 0
        %749 = vmatprep.subr.bf16.mxu0 0
        %750 = vmatpush1.bf16.msra.mxu0 0
        %751 = vmatprep.subr.bf16.mxu0 0
        %752 = vmatpush1.bf16.msra.mxu0 0
        %753 = vmatprep.subr.bf16.mxu0 0
        %754 = vmatpush1.bf16.msra.mxu0 0
        %755 = vmatprep.subr.bf16.mxu0 0
        %756 = vmatpush1.bf16.msra.mxu0 0
        %757 = vmatprep.subr.bf16.mxu0 0
        %758 = vmatpush1.bf16.msra.mxu0 0
        %759 = vmatprep.subr.bf16.mxu0 0
        %760 = vmatpush1.bf16.msra.mxu0 0
        %761 = vmatprep.subr.bf16.mxu0 0
        %762 = vmatpush1.bf16.msra.mxu0 0
        %763 = vmatprep.mubr.bf16.mxu0 0
        %764 = vmatmul.mubr.bf16.gmra.mrb[0].mxu0 %v305
        %v765 = vpop.f32.mrb[0].mxu0
        %v766 = vadd.f32 0.0, %v765
        %v767 = vpop.f32.mrb[0].mxu0
        %v768 = vadd.f32 0.0, %v767
        %v769 = vpop.f32.mrb[0].mxu0
        %v770 = vpop.f32.mrb[0].mxu0
        %771 = vdwg.mxu0
        %772 = vmatprep.subr.bf16.mxu0 %v567
        %773 = vmatpush1.bf16.msra.mxu0 %v566
        %774 = vmatprep.subr.bf16.mxu0 %v575
        %775 = vmatpush1.bf16.msra.mxu0 %v574
        %776 = vmatprep.subr.bf16.mxu0 %v583
        %777 = vmatpush1.bf16.msra.mxu0 %v582
        %778 = vmatprep.subr.bf16.mxu0 %v591
        %779 = vmatpush1.bf16.msra.mxu0 %v590
        %780 = vmatprep.subr.bf16.mxu0 %v599
        %781 = vmatpush1.bf16.msra.mxu0 %v598
        %782 = vmatprep.subr.bf16.mxu0 %v607
        %783 = vmatpush1.bf16.msra.mxu0 %v606
        %784 = vmatprep.subr.bf16.mxu0 %v615
        %785 = vmatpush1.bf16.msra.mxu0 %v614
        %786 = vmatprep.subr.bf16.mxu0 %v623
        %787 = vmatpush1.bf16.msra.mxu0 %v622
        %788 = vmatprep.subr.bf16.mxu0 0
        %789 = vmatpush1.bf16.msra.mxu0 0
        %790 = vmatprep.subr.bf16.mxu0 0
        %791 = vmatpush1.bf16.msra.mxu0 0
        %792 = vmatprep.subr.bf16.mxu0 0
        %793 = vmatpush1.bf16.msra.mxu0 0
        %794 = vmatprep.subr.bf16.mxu0 0
        %795 = vmatpush1.bf16.msra.mxu0 0
        %796 = vmatprep.subr.bf16.mxu0 0
        %797 = vmatpush1.bf16.msra.mxu0 0
        %798 = vmatprep.subr.bf16.mxu0 0
        %799 = vmatpush1.bf16.msra.mxu0 0
        %800 = vmatprep.subr.bf16.mxu0 0
        %801 = vmatpush1.bf16.msra.mxu0 0
        %802 = vmatprep.subr.bf16.mxu0 0
        %803 = vmatpush1.bf16.msra.mxu0 0
        %804 = vmatprep.mubr.bf16.mxu0 0
        %805 = vmatmul.mubr.bf16.gmra.mrb[0].mxu0 %v305
        %v806 = vpop.f32.mrb[0].mxu0
        %v807 = vadd.f32 0.0, %v806
        %v808 = vpop.f32.mrb[0].mxu0
        %v809 = vadd.f32 0.0, %v808
        %v810 = vpop.f32.mrb[0].mxu0
        %v811 = vpop.f32.mrb[0].mxu0
        %812 = vdwg.mxu0
        %813 = vmatprep.subr.bf16.mxu0 %v569
        %814 = vmatpush1.bf16.msra.mxu0 %v568
        %815 = vmatprep.subr.bf16.mxu0 %v577
        %816 = vmatpush1.bf16.msra.mxu0 %v576
        %817 = vmatprep.subr.bf16.mxu0 %v585
        %818 = vmatpush1.bf16.msra.mxu0 %v584
        %819 = vmatprep.subr.bf16.mxu0 %v593
        %820 = vmatpush1.bf16.msra.mxu0 %v592
        %821 = vmatprep.subr.bf16.mxu0 %v601
        %822 = vmatpush1.bf16.msra.mxu0 %v600
        %823 = vmatprep.subr.bf16.mxu0 %v609
        %824 = vmatpush1.bf16.msra.mxu0 %v608
        %825 = vmatprep.subr.bf16.mxu0 %v617
        %826 = vmatpush1.bf16.msra.mxu0 %v616
        %827 = vmatprep.subr.bf16.mxu0 %v625
        %828 = vmatpush1.bf16.msra.mxu0 %v624
        %829 = vmatprep.subr.bf16.mxu0 0
        %830 = vmatpush1.bf16.msra.mxu0 0
        %831 = vmatprep.subr.bf16.mxu0 0
        %832 = vmatpush1.bf16.msra.mxu0 0
        %833 = vmatprep.subr.bf16.mxu0 0
        %834 = vmatpush1.bf16.msra.mxu0 0
        %835 = vmatprep.subr.bf16.mxu0 0
        %836 = vmatpush1.bf16.msra.mxu0 0
        %837 = vmatprep.subr.bf16.mxu0 0
        %838 = vmatpush1.bf16.msra.mxu0 0
        %839 = vmatprep.subr.bf16.mxu0 0
        %840 = vmatpush1.bf16.msra.mxu0 0
        %841 = vmatprep.subr.bf16.mxu0 0
        %842 = vmatpush1.bf16.msra.mxu0 0
        %843 = vmatprep.subr.bf16.mxu0 0
        %844 = vmatpush1.bf16.msra.mxu0 0
        %845 = vmatprep.mubr.bf16.mxu0 0
        %846 = vmatmul.mubr.bf16.gmra.mrb[0].mxu0 %v305
        %v847 = vpop.f32.mrb[0].mxu0
        %v848 = vadd.f32 0.0, %v847
        %v849 = vpop.f32.mrb[0].mxu0
        %v850 = vadd.f32 0.0, %v849
        %v851 = vpop.f32.mrb[0].mxu0
        %v852 = vpop.f32.mrb[0].mxu0
        %853 = vdwg.mxu0
        %v854 = vmul.f32 %v725, 2.0
        %v855 = vmul.f32 %v727, 2.0
        %v856 = vmul.f32 %v766, 2.0
        %v857 = vmul.f32 %v768, 2.0
        %v858 = vmul.f32 %v807, 2.0
        %v859 = vmul.f32 %v809, 2.0
        %v860 = vmul.f32 %v848, 2.0
        %v861 = vmul.f32 %v850, 2.0
        %v862 = vld [vmem:[%s268] sm:$0xff]
        %v863 = vld [vmem:[%s268 + $0x8] sm:$0xff]
        %v864 = vld [vmem:[%s268 + $0x10] sm:$0xff]
        %v865 = vld [vmem:[%s268 + $0x18] sm:$0xff]
        %v866 = vunpack.c.l.bf16 %v862
        %v867 = vunpack.c.h.bf16 %v862
        %v868 = vunpack.c.l.bf16 %v863
        %v869 = vunpack.c.h.bf16 %v863
        %v870 = vunpack.c.l.bf16 %v864
        %v871 = vunpack.c.h.bf16 %v864
        %v872 = vunpack.c.l.bf16 %v865
        %v873 = vunpack.c.h.bf16 %v865
        %v874 = vadd.f32 %v854, %v866
        %v875 = vadd.f32 %v855, %v867
        %v876 = vadd.f32 %v856, %v868
        %v877 = vadd.f32 %v857, %v869
        %v878 = vadd.f32 %v858, %v870
        %v879 = vadd.f32 %v859, %v871
        %v880 = vadd.f32 %v860, %v872
        %v881 = vadd.f32 %v861, %v873
        %v882 = vmax.f32 %v874, %v875
        %v883 = vmax.f32 %v882, %v876
        %v884 = vmax.f32 %v883, %v877
        %v885 = vmax.f32 %v884, %v878
        %v886 = vmax.f32 %v885, %v879
        %v887 = vmax.f32 %v886, %v880
        %v888 = vmax.f32 %v887, %v881
        %v889 = vsub.f32 %v874, %v888
        %v890 = vmul.f32 %v889, 1.442695
        %v891 = vpow.pop %v890
        %v892 = vadd.f32 %v891, 0.0
        %v893 = vmul.f32 %v891, -1.0
        %v894 = vadd.f32 %v893, 0.0
        %v895 = vsub.f32 %v875, %v888
        %v896 = vmul.f32 %v895, 1.442695
        %v897 = vpow.pop %v896
        %v898 = vadd.f32 %v892, %v897
        %v899 = vmul.f32 %v897, -0.71428573
        %v900 = vadd.f32 %v894, %v899
        %v901 = vsub.f32 %v876, %v888
        %v902 = vmul.f32 %v901, 1.442695
        %v903 = vpow.pop %v902
        %v904 = vadd.f32 %v898, %v903
        %v905 = vmul.f32 %v903, -0.42857143
        %v906 = vadd.f32 %v900, %v905
        %v907 = vsub.f32 %v877, %v888
        %v908 = vmul.f32 %v907, 1.442695
        %v909 = vpow.pop %v908
        %v910 = vadd.f32 %v904, %v909
        %v911 = vmul.f32 %v909, -0.14285715
        %v912 = vadd.f32 %v906, %v911
        %v913 = vsub.f32 %v878, %v888
        %v914 = vmul.f32 %v913, 1.442695
        %v915 = vpow.pop %v914
        %v916 = vadd.f32 %v910, %v915
        %v917 = vmul.f32 %v915, 0.14285715
        %v918 = vadd.f32 %v912, %v917
        %v919 = vsub.f32 %v879, %v888
        %v920 = vmul.f32 %v919, 1.442695
        %v921 = vpow.pop %v920
        %v922 = vadd.f32 %v916, %v921
        %v923 = vmul.f32 %v921, 0.42857143
        %v924 = vadd.f32 %v918, %v923
        %v925 = vsub.f32 %v880, %v888
        %v926 = vmul.f32 %v925, 1.442695
        %v927 = vpow.pop %v926
        %v928 = vadd.f32 %v922, %v927
        %v929 = vmul.f32 %v927, 0.71428573
        %v930 = vadd.f32 %v924, %v929
        %v931 = vsub.f32 %v881, %v888
        %v932 = vmul.f32 %v931, 1.442695
        %v933 = vpow.pop %v932
        %v934 = vadd.f32 %v928, %v933
        %v935 = vadd.f32 %v930, %v933
        %v936 = vrcp.pop %v934
        %v937 = vmul.f32 %v935, %v936
        %v938 = vpack.c.bf16 %v937, %v937
        %v939 = vld [vmem:[#allocation8] sm:$0xf]
        %v940 = vld [vmem:[#allocation8 + $0x4] sm:$0xf]
        %v941 = vld [vmem:[#allocation8 + $0x8] sm:$0xf]
        %v942 = vld [vmem:[#allocation8 + $0xc] sm:$0xf]
        %v943 = vld [vmem:[#allocation8 + $0x10] sm:$0xf]
        %v944 = vld [vmem:[#allocation8 + $0x14] sm:$0xf]
        %v945 = vld [vmem:[#allocation8 + $0x18] sm:$0xf]
        %v946 = vld [vmem:[#allocation8 + $0x1c] sm:$0xf]
        %v947 = vld [vmem:[#allocation8 + $0x20] sm:$0xf]
        %v948 = vld [vmem:[#allocation8 + $0x24] sm:$0xf]
        %v949 = vld [vmem:[#allocation8 + $0x28] sm:$0xf]
        %v950 = vld [vmem:[#allocation8 + $0x2c] sm:$0xf]
        %v951 = vld [vmem:[#allocation8 + $0x30] sm:$0xf]
        %v952 = vld [vmem:[#allocation8 + $0x34] sm:$0xf]
        %v953 = vld [vmem:[#allocation8 + $0x38] sm:$0xf]
        %v954 = vld [vmem:[#allocation8 + $0x3c] sm:$0xf]
        %v955 = vld [vmem:[%s4] sm:$0x1]
        %v957 = vlaneseq
        %v958 = vshrl.u32 %v957, 7
        %v959 = vsub.s32 0, %v958
        %v960 = vrot.slane %v955, %v959
        %v978 = vunpack.c.l.b16 %v939
        %v979 = vunpack.c.l.b16 %v940
        %v980 = vunpack.c.l.b16 %v941
        %v981 = vunpack.c.l.b16 %v942
        %v982 = vunpack.c.l.b16 %v943
        %v983 = vunpack.c.l.b16 %v944
        %v984 = vunpack.c.l.b16 %v945
        %v985 = vunpack.c.l.b16 %v946
        %v986 = vunpack.c.l.b16 %v947
        %v987 = vunpack.c.l.b16 %v948
        %v988 = vunpack.c.l.b16 %v949
        %v989 = vunpack.c.l.b16 %v950
        %v990 = vunpack.c.l.b16 %v951
        %v991 = vunpack.c.l.b16 %v952
        %v992 = vunpack.c.l.b16 %v953
        %v993 = vunpack.c.l.b16 %v954
        %v994 = vpack.c.b16 %v979, %v978
        %v995 = vpack.c.b16 %v981, %v980
        %v996 = vpack.c.b16 %v983, %v982
        %v997 = vpack.c.b16 %v985, %v984
        %v998 = vpack.c.b16 %v987, %v986
        %v999 = vpack.c.b16 %v989, %v988
        %v1000 = vpack.c.b16 %v991, %v990
        %v1001 = vpack.c.b16 %v993, %v992
        %1010 = vmatprep.subr.bf16.mxu0 0
        %1011 = vmatpush1.bf16.msra.mxu0 %v994
        %1012 = vmatprep.subr.bf16.mxu0 0
        %1013 = vmatpush1.bf16.msra.mxu0 %v995
        %1014 = vmatprep.subr.bf16.mxu0 0
        %1015 = vmatpush1.bf16.msra.mxu0 %v996
        %1016 = vmatprep.subr.bf16.mxu0 0
        %1017 = vmatpush1.bf16.msra.mxu0 %v997
        %1018 = vmatprep.subr.bf16.mxu0 0
        %1019 = vmatpush1.bf16.msra.mxu0 %v998
        %1020 = vmatprep.subr.bf16.mxu0 0
        %1021 = vmatpush1.bf16.msra.mxu0 %v999
        %1022 = vmatprep.subr.bf16.mxu0 0
        %1023 = vmatpush1.bf16.msra.mxu0 %v1000
        %1024 = vmatprep.subr.bf16.mxu0 0
        %1025 = vmatpush1.bf16.msra.mxu0 %v1001
        %1026 = vmatprep.subr.bf16.mxu0 0
        %1027 = vmatpush1.bf16.msra.mxu0 0
        %1028 = vmatprep.subr.bf16.mxu0 0
        %1029 = vmatpush1.bf16.msra.mxu0 0
        %1030 = vmatprep.subr.bf16.mxu0 0
        %1031 = vmatpush1.bf16.msra.mxu0 0
        %1032 = vmatprep.subr.bf16.mxu0 0
        %1033 = vmatpush1.bf16.msra.mxu0 0
        %1034 = vmatprep.subr.bf16.mxu0 0
        %1035 = vmatpush1.bf16.msra.mxu0 0
        %1036 = vmatprep.subr.bf16.mxu0 0
        %1037 = vmatpush1.bf16.msra.mxu0 0
        %1038 = vmatprep.subr.bf16.mxu0 0
        %1039 = vmatpush1.bf16.msra.mxu0 0
        %1040 = vmatprep.subr.bf16.mxu0 0
        %1041 = vmatpush1.bf16.msra.mxu0 0
        %1042 = vmatprep.mubr.bf16.mxu0 0
        %1043 = vmatmul.mubr.bf16.gmra.mrb[0].mxu0 %v938
        %v1044 = vpop.f32.mrb[0].mxu0
        %v1045 = vadd.f32 %v960, %v1044
        %v1046 = vpop.f32.mrb[0].mxu0
        %v1047 = vpop.f32.mrb[0].mxu0
        %v1048 = vpop.f32.mrb[0].mxu0
        %1049 = vdwg.mxu0
        %v1050 = vmax.f32 %v1045, 0.0
        %1051 = vst [vmem:[%s303] sm:$0xff] %v1050
        %s1052 = sand.u32 %s146, 1
        %s1053 = scalar_lea.sflag [#allocation4], %s1052
        %s1054 = sand.u32 %s146, 1
        %s1055 = smul.addr %s1054, 8
        %s1056 = scalar_lea.vmem [#allocation9], %s1055
        // Predicated region
        $region57: #{tpu_custom_call.1} parent=39 // pred_check
          %p1057 = pneg %p156
        $region58: #{tpu_custom_call.1} parent=39 // pred_check_branch
          %1059 = sbr.rel (%p1057) target = $region60
        $region59: #{tpu_custom_call.1} parent=39 // pred_region
          %s1061 = ssub.s32 128, 128
          %1062 = vsyncadd %s1053, %s1061
          %s1063 = smul.addr %s23, 128
          %s1064 = scalar_lea.hbm %s5, %s1063
          %s1066 = sshll.u32 %s1056, 4
          %s1067 = int_to_ptr.vmem [resolvable:$true] %s1066
          %1069 = dma.vmem_to_hbm [thread:$0]  %s1067, 128, %s1064, %s1053
        $region60: #{tpu_custom_call.1} parent=39 // pred_fallthru
          _
      $region40: #{tpu_custom_call.1} parent=5 // pred_fallthru
        _
      %p1070 = scmp.le.s32.totalorder 2, %s18
      // Predicated region
      $region61: #{tpu_custom_call.1} parent=5 // pred_check
        %p1071 = pneg %p1070
      $region62: #{tpu_custom_call.1} parent=5 // pred_check_branch
        %1073 = sbr.rel (%p1071) target = $region64
      $region63: #{tpu_custom_call.1} parent=5 // pred_region
        %s1074 = ssub.s32 %s18, 2
        // Predicated region
        $region65: #{tpu_custom_call.1} parent=63 // pred_check
          %p1075 = pneg %p162
        $region66: #{tpu_custom_call.1} parent=63 // pred_check_branch
          %1077 = sbr.rel (%p1075) target = $region68
        $region67: #{tpu_custom_call.1} parent=63 // pred_region
          %s1078 = sand.u32 %s147, 1
          %s1079 = scalar_lea.sflag [#allocation4], %s1078
          %s1080 = sand.u32 %s147, 1
          %s1081 = smul.addr %s1080, 8
          %s1082 = scalar_lea.vmem [#allocation9], %s1081
          %1083 = dma.done %s1079, 128
        $region68: #{tpu_custom_call.1} parent=63 // pred_fallthru
          _
      $region64: #{tpu_custom_call.1} parent=5 // pred_fallthru
        _
    $region6: #{tpu_custom_call.1} parent=1 // loop_footer
      %s22 = sadd.s32 1, %s18
    $region7: #{tpu_custom_call.1} parent=1 // loop_footer_branch
      %17 = sbr.rel target = $region3
    $region8: #{tpu_custom_call.1} parent=1 // loop_exit
      _
    %1084 = vsyncpa [#allocation3], 1
    %s1085 = scalar_lea.sflag [#allocation3], 1
    %1086 = vsyncpa %s1085, 1
    %1087 = vsyncpa [#allocation6], 1
    %1088 = vsyncpa [#allocation4], 1
    %s1089 = scalar_lea.sflag [#allocation4], 1
    %1090 = vsyncpa %s1089, 1

</llo_original>
